<compile_context>
chip_gen: v5e
topology: v5e:2x2
jax: 0.10.0
libtpu: 0.0.40
codegen_flags: <defaults>
</compile_context>

<pallas_src>
import functools

import jax
import jax.numpy as jnp
from jax.experimental import pallas as pl
from jax.experimental.pallas import tpu as pltpu

# Small stand-in shapes for the module's 5000 -> 5000 -> 500 MLP.  Deliberately
# NOT multiples of 128 so the padding path (needed at the real shapes) is exercised.
BATCH = 24
D_IN = 500
D_HID = 500
D_OUT = 120


def _round_up(x, m):
    return (x + m - 1) // m * m


def _pad_to(arr, shape):
    pads = [(0, t - s) for s, t in zip(arr.shape, shape)]
    if all(p == (0, 0) for p in pads):
        return arr
    return jnp.pad(arr, pads)


def mlp_kernel(x_ref, w1_ref, b1_ref, w2_ref, b2_ref, o_ref, acc_ref):
    """One (batch-tile i, hidden-tile j) step of relu(x@W1+b1) @ W2 + b2."""
    j = pl.program_id(1)

    @pl.when(j == 0)
    def _():
        acc_ref[...] = jnp.zeros_like(acc_ref)

    # net1 slab: (tb, d_in) @ (d_in, th) on the MXU, f32 accumulation;
    # bias add + ReLU epilogue kept in f32 on the VPU.
    h = jnp.dot(x_ref[...], w1_ref[...], preferred_element_type=jnp.float32)
    h = jnp.maximum(h + b1_ref[...], 0.0)

    # net2 partial product: (tb, th) @ (th, d_out), accumulated in f32 scratch.
    acc_ref[...] += jnp.dot(h.astype(w2_ref.dtype), w2_ref[...],
                            preferred_element_type=jnp.float32)

    @pl.when(j == pl.num_programs(1) - 1)
    def _():
        o_ref[...] = (acc_ref[...] + b2_ref[...]).astype(o_ref.dtype)


@functools.partial(jax.jit, static_argnames=("tb", "th"))
def toy_model_forward(x, w1_t, b1, w2_t, b2, *, tb=128, th=512):
    """x:(B,d_in); w1_t:(d_in,d_hid); b1:(d_hid,); w2_t:(d_hid,d_out); b2:(d_out,)."""
    B, d_in = x.shape
    d_hid = w1_t.shape[1]
    d_out = w2_t.shape[1]
    out_dtype = x.dtype

    # Pad to MXU/lane-friendly multiples of 128; batch padded up to the row tile.
    Bp = _round_up(B, tb)
    d_in_p = _round_up(d_in, 128)
    d_hid_p = _round_up(d_hid, 128)
    th = min(th, d_hid_p)              # th stays a multiple of 128
    d_hid_p = _round_up(d_hid_p, th)
    d_out_p = _round_up(d_out, 128)

    # bf16 matmul operands (f32 accumulation in-kernel), f32 biases.
    xp = _pad_to(x.astype(jnp.bfloat16), (Bp, d_in_p))
    w1p = _pad_to(w1_t.astype(jnp.bfloat16), (d_in_p, d_hid_p))
    b1p = _pad_to(b1.reshape(1, d_hid).astype(jnp.float32), (1, d_hid_p))
    w2p = _pad_to(w2_t.astype(jnp.bfloat16), (d_hid_p, d_out_p))
    b2p = _pad_to(b2.reshape(1, d_out).astype(jnp.float32), (1, d_out_p))

    grid = (Bp // tb, d_hid_p // th)

    # Scoped-VMEM budget: double-buffered streamed operands + resident x/output
    # tiles + the f32 accumulator, plus headroom for compiler temporaries.
    vmem_need = (2 * tb * d_in_p * 2                    # x tile (bf16, resident)
                 + 2 * (d_in_p * th * 2                 # W1 slab (bf16, 2 bufs)
                        + th * 4                        # b1 slab (f32)
                        + th * d_out_p * 2)             # W2 slab (bf16, 2 bufs)
                 + 2 * d_out_p * 4                      # b2 (f32)
                 + 2 * tb * d_out_p * out_dtype.itemsize  # output tile
                 + tb * d_out_p * 4)                    # f32 accumulator scratch
    vmem_limit = int(min(vmem_need + (8 << 20), 100 << 20))

    cost = pl.CostEstimate(
        flops=2 * Bp * (d_in_p * d_hid_p + d_hid_p * d_out_p),
        transcendentals=0,
        bytes_accessed=(xp.size * 2
                        + Bp * d_out_p * out_dtype.itemsize
                        + grid[0] * (w1p.size * 2 + w2p.size * 2)
                        + b1p.size * 4 + b2p.size * 4),
    )

    out = pl.pallas_call(
        mlp_kernel,
        out_shape=jax.ShapeDtypeStruct((Bp, d_out_p), out_dtype),
        grid_spec=pltpu.PrefetchScalarGridSpec(
            num_scalar_prefetch=0,
            grid=grid,
            in_specs=[
                pl.BlockSpec((tb, d_in_p), lambda i, j: (i, 0)),     # x batch tile (j-invariant)
                pl.BlockSpec((d_in_p, th), lambda i, j: (0, j)),     # W1 column slab
                pl.BlockSpec((1, th), lambda i, j: (0, j)),          # b1 slab
                pl.BlockSpec((th, d_out_p), lambda i, j: (j, 0)),    # W2 row slab
                pl.BlockSpec((1, d_out_p), lambda i, j: (0, 0)),     # b2 (invariant)
            ],
            out_specs=pl.BlockSpec((tb, d_out_p), lambda i, j: (i, 0)),
            scratch_shapes=[pltpu.VMEM((tb, d_out_p), jnp.float32)],
        ),
        compiler_params=pltpu.CompilerParams(
            dimension_semantics=("parallel", "arbitrary"),
            vmem_limit_bytes=vmem_limit,
        ),
        cost_estimate=cost,
    )(xp, w1p, b1p, w2p, b2p)

    return out[:B, :d_out]


def init_params(key):
    """PyTorch nn.Linear init: U(-1/sqrt(fan_in), 1/sqrt(fan_in)); weights stored (in,out)."""
    k1, k2, k3, k4 = jax.random.split(key, 4)
    bound1 = 1.0 / (D_IN ** 0.5)
    bound2 = 1.0 / (D_HID ** 0.5)
    w1_t = jax.random.uniform(k1, (D_IN, D_HID), jnp.float32, -bound1, bound1)
    b1 = jax.random.uniform(k2, (D_HID,), jnp.float32, -bound1, bound1)
    w2_t = jax.random.uniform(k3, (D_HID, D_OUT), jnp.float32, -bound2, bound2)
    b2 = jax.random.uniform(k4, (D_OUT,), jnp.float32, -bound2, bound2)
    return w1_t, b1, w2_t, b2


if __name__ == "__main__":
    key = jax.random.PRNGKey(0)
    kx, kp = jax.random.split(key)
    x = jax.random.normal(kx, (BATCH, D_IN), jnp.float32)
    w1_t, b1, w2_t, b2 = init_params(kp)

    out = jax.block_until_ready(toy_model_forward(x, w1_t, b1, w2_t, b2))

    # Reference in plain JAX with the same bf16 operands / f32 accumulation.
    xb = x.astype(jnp.bfloat16)
    h_ref = jnp.maximum(
        jnp.dot(xb, w1_t.astype(jnp.bfloat16), preferred_element_type=jnp.float32)
        + b1[None, :], 0.0)
    ref = (jnp.dot(h_ref.astype(jnp.bfloat16), w2_t.astype(jnp.bfloat16),
                   preferred_element_type=jnp.float32) + b2[None, :]).astype(x.dtype)

    assert out.shape == (BATCH, D_OUT)
    assert jnp.allclose(out, ref, atol=1e-2, rtol=1e-2), \
        float(jnp.max(jnp.abs(out - ref)))

    print("KERNEL_OK")
</pallas_src>

<mosaic_0001>
module attributes {stable_mosaic.version = 11 : i64} {
  func.func @mlp_kernel(%arg0: i32, %arg1: i32, %arg2: memref<128x512xbf16, #tpu.memory_space<vmem>>, %arg3: memref<512x512xbf16, #tpu.memory_space<vmem>>, %arg4: memref<1x512xf32, #tpu.memory_space<vmem>>, %arg5: memref<512x128xbf16, #tpu.memory_space<vmem>>, %arg6: memref<1x128xf32, #tpu.memory_space<vmem>>, %arg7: memref<128x128xf32, #tpu.memory_space<vmem>>, %arg8: memref<128x128xf32, #tpu.memory_space<vmem>>) attributes {dimension_semantics = [#tpu.dimension_semantics<parallel>, #tpu.dimension_semantics<arbitrary>], iteration_bounds = array<i64: 1, 1>, scalar_prefetch = 0 : i64, scratch_operands = 1 : i64, tpu.core_type = #tpu.core_type<tc>, window_params = [{transform_indices = @transform_0, window_bounds = array<i64: 128, 512>}, {transform_indices = @transform_1, window_bounds = array<i64: 512, 512>}, {transform_indices = @transform_2, window_bounds = array<i64: 1, 512>}, {transform_indices = @transform_3, window_bounds = array<i64: 512, 128>}, {pipeline_mode = #tpu.pipeline_mode<synchronous>, transform_indices = @transform_4, window_bounds = array<i64: 1, 128>}, {transform_indices = @transform_5, window_bounds = array<i64: 128, 128>}]} {
    %c0_i32 = arith.constant 0 : i32
    %0 = arith.cmpi eq, %arg1, %c0_i32 : i32
    %1 = arith.extui %0 : i1 to i32
    %c0_i32_0 = arith.constant 0 : i32
    %2 = arith.cmpi ne, %1, %c0_i32_0 : i32
    scf.if %2 {
      %cst_16 = arith.constant 0.000000e+00 : f32
      %20 = vector.broadcast %cst_16 : f32 to vector<128x128xf32>
      %c0_17 = arith.constant 0 : index
      %c0_18 = arith.constant 0 : index
      %21 = vector.load %arg8[%c0_17, %c0_18] : memref<128x128xf32, #tpu.memory_space<vmem>>, vector<128x128xf32>
      tpu.vector_store %arg8[%c0_17, %c0_18], %20 {strides = array<i32>} : memref<128x128xf32, #tpu.memory_space<vmem>>, vector<128x128xf32>,
    } else {
    }
    %c0 = arith.constant 0 : index
    %c0_1 = arith.constant 0 : index
    %3 = vector.load %arg2[%c0, %c0_1] : memref<128x512xbf16, #tpu.memory_space<vmem>>, vector<128x512xbf16>
    %c0_2 = arith.constant 0 : index
    %c0_3 = arith.constant 0 : index
    %4 = vector.load %arg3[%c0_2, %c0_3] : memref<512x512xbf16, #tpu.memory_space<vmem>>, vector<512x512xbf16>
    %cst = arith.constant dense<0.000000e+00> : vector<128x512xf32>
    %5 = tpu.matmul %3, %4, %cst {dimension_numbers = #tpu.dot_dimension_numbers<[1], [0], [0], [1], [0, 0, 1, 1], [], []>} : vector<128x512xbf16>, vector<512x512xbf16>, vector<128x512xf32> -> vector<128x512xf32>
    %c0_4 = arith.constant 0 : index
    %c0_5 = arith.constant 0 : index
    %6 = vector.load %arg4[%c0_4, %c0_5] : memref<1x512xf32, #tpu.memory_space<vmem>>, vector<1x512xf32>
    %7 = vector.broadcast %6 : vector<1x512xf32> to vector<128x512xf32>
    %8 = arith.addf %5, %7 : vector<128x512xf32>
    %cst_6 = arith.constant 0.000000e+00 : f32
    %9 = vector.broadcast %cst_6 : f32 to vector<128x512xf32>
    %10 = arith.maximumf %8, %9 : vector<128x512xf32>
    %c0_7 = arith.constant 0 : index
    %c0_8 = arith.constant 0 : index
    %11 = vector.load %arg8[%c0_7, %c0_8] : memref<128x128xf32, #tpu.memory_space<vmem>>, vector<128x128xf32>
    %12 = arith.truncf %10 : vector<128x512xf32> to vector<128x512xbf16>
    %c0_9 = arith.constant 0 : index
    %c0_10 = arith.constant 0 : index
    %13 = vector.load %arg5[%c0_9, %c0_10] : memref<512x128xbf16, #tpu.memory_space<vmem>>, vector<512x128xbf16>
    %cst_11 = arith.constant dense<0.000000e+00> : vector<128x128xf32>
    %14 = tpu.matmul %12, %13, %cst_11 {dimension_numbers = #tpu.dot_dimension_numbers<[1], [0], [0], [1], [0, 0, 1, 1], [], []>} : vector<128x512xbf16>, vector<512x128xbf16>, vector<128x128xf32> -> vector<128x128xf32>
    %15 = arith.addf %11, %14 : vector<128x128xf32>
    %c0_12 = arith.constant 0 : index
    %c0_13 = arith.constant 0 : index
    %16 = vector.load %arg8[%c0_12, %c0_13] : memref<128x128xf32, #tpu.memory_space<vmem>>, vector<128x128xf32>
    tpu.vector_store %arg8[%c0_12, %c0_13], %15 {strides = array<i32>} : memref<128x128xf32, #tpu.memory_space<vmem>>, vector<128x128xf32>,
    %c0_i32_14 = arith.constant 0 : i32
    %17 = arith.cmpi eq, %arg1, %c0_i32_14 : i32
    %18 = arith.extui %17 : i1 to i32
    %c0_i32_15 = arith.constant 0 : i32
    %19 = arith.cmpi ne, %18, %c0_i32_15 : i32
    scf.if %19 {
      %c0_16 = arith.constant 0 : index
      %c0_17 = arith.constant 0 : index
      %20 = vector.load %arg8[%c0_16, %c0_17] : memref<128x128xf32, #tpu.memory_space<vmem>>, vector<128x128xf32>
      %c0_18 = arith.constant 0 : index
      %c0_19 = arith.constant 0 : index
      %21 = vector.load %arg6[%c0_18, %c0_19] : memref<1x128xf32, #tpu.memory_space<vmem>>, vector<1x128xf32>
      %22 = vector.broadcast %21 : vector<1x128xf32> to vector<128x128xf32>
      %23 = arith.addf %20, %22 : vector<128x128xf32>
      %c0_20 = arith.constant 0 : index
      %c0_21 = arith.constant 0 : index
      %24 = vector.load %arg7[%c0_20, %c0_21] : memref<128x128xf32, #tpu.memory_space<vmem>>, vector<128x128xf32>
      tpu.vector_store %arg7[%c0_20, %c0_21], %23 {strides = array<i32>} : memref<128x128xf32, #tpu.memory_space<vmem>>, vector<128x128xf32>,
    } else {
    }
    return
  }
  func.func @transform_0(%arg0: i32, %arg1: i32) -> (i32, i32) {
    %c0_i32 = arith.constant 0 : i32
    %c0_i32_0 = arith.constant 0 : i32
    return %arg0, %c0_i32 : i32, i32
  }
  func.func @transform_1(%arg0: i32, %arg1: i32) -> (i32, i32) {
    %c0_i32 = arith.constant 0 : i32
    %c0_i32_0 = arith.constant 0 : i32
    return %c0_i32, %arg1 : i32, i32
  }
  func.func @transform_2(%arg0: i32, %arg1: i32) -> (i32, i32) {
    %c0_i32 = arith.constant 0 : i32
    %c0_i32_0 = arith.constant 0 : i32
    return %c0_i32, %arg1 : i32, i32
  }
  func.func @transform_3(%arg0: i32, %arg1: i32) -> (i32, i32) {
    %c0_i32 = arith.constant 0 : i32
    %c0_i32_0 = arith.constant 0 : i32
    return %arg1, %c0_i32 : i32, i32
  }
  func.func @transform_4(%arg0: i32, %arg1: i32) -> (i32, i32) {
    %c0_i32 = arith.constant 0 : i32
    %c0_i32_0 = arith.constant 0 : i32
    %c0_i32_1 = arith.constant 0 : i32
    return %c0_i32, %c0_i32_0 : i32, i32
  }
  func.func @transform_5(%arg0: i32, %arg1: i32) -> (i32, i32) {
    %c0_i32 = arith.constant 0 : i32
    %c0_i32_0 = arith.constant 0 : i32
    return %arg0, %c0_i32 : i32, i32
  }
}

</mosaic_0001>

<llo_original>
// kernel: toy_model_forward.1
$region0: #{toy_model_forward.1}
  #allocation0 [shape = 'u32[]', space=smem, size = 0x4, offset = 0x4, fixed_abs, tag = 'smem constant byte address 0x4 - core index']
  #allocation1 [shape = 'u32[72,128]{1,0:T(1,128)}', space=vmem, size = 0x9000, scoped, tag = 'internal scratch']
  #allocation2 [shape = 'f32[128,128]{1,0:T(8,128)}', space=vmem, size = 0x10000, scoped, tag = 'scratch operand']
  %s0 = inlined_call_operand.vmem [shape: bf16[128,512], index: 0, kind: input, shape index: {}]
  %s1 = inlined_call_operand.vmem [shape: bf16[512,512], index: 1, kind: input, shape index: {}]
  %s2 = inlined_call_operand.vmem [shape: f32[1,512], index: 2, kind: input, shape index: {}]
  %s3 = inlined_call_operand.vmem [shape: bf16[512,128], index: 3, kind: input, shape index: {}]
  %s4 = inlined_call_operand.vmem [shape: f32[1,128], index: 4, kind: input, shape index: {}]
  %s5 = inlined_call_operand.vmem [shape: f32[128,128], index: 5, kind: output, shape index: {}]
  %s6 = sld [smem:[#allocation0]]
  $region38: #{toy_model_forward.1} parent=0
    _
  %s8 = ssub.s32 1, %s6
  %s9 = scalar_select 0, %s8, %s6
  // Predicated region
  $region2: #{toy_model_forward.1} parent=0 // pred_check
    _
  $region3: #{toy_model_forward.1} parent=0 // pred_check_branch
    %11 = sbr.rel (0) target = $region5
  $region4: #{toy_model_forward.1} parent=0 // pred_region
    _
  $region5: #{toy_model_forward.1} parent=0 // pred_fallthru
    _
  // Predicated region
  $region6: #{toy_model_forward.1} parent=0 // pred_check
    _
  $region7: #{toy_model_forward.1} parent=0 // pred_check_branch
    %13 = sbr.rel (0) target = $region9
  $region8: #{toy_model_forward.1} parent=0 // pred_region
    _
  $region9: #{toy_model_forward.1} parent=0 // pred_fallthru
    _
  // Predicated region
  $region10: #{toy_model_forward.1} parent=0 // pred_check
    _
  $region11: #{toy_model_forward.1} parent=0 // pred_check_branch
    %15 = sbr.rel (0) target = $region13
  $region12: #{toy_model_forward.1} parent=0 // pred_region
    _
  $region13: #{toy_model_forward.1} parent=0 // pred_fallthru
    _
  // Predicated region
  $region14: #{toy_model_forward.1} parent=0 // pred_check
    _
  $region15: #{toy_model_forward.1} parent=0 // pred_check_branch
    %17 = sbr.rel (0) target = $region17
  $region16: #{toy_model_forward.1} parent=0 // pred_region
    _
  $region17: #{toy_model_forward.1} parent=0 // pred_fallthru
    _
  // Predicated region
  $region18: #{toy_model_forward.1} parent=0 // pred_check
    _
  $region19: #{toy_model_forward.1} parent=0 // pred_check_branch
    %19 = sbr.rel (0) target = $region21
  $region20: #{toy_model_forward.1} parent=0 // pred_region
    _
  $region21: #{toy_model_forward.1} parent=0 // pred_fallthru
    _
  %p20 = scmp.eq.s32.totalorder 0, 0
  // Predicated region
  $region22: #{toy_model_forward.1} parent=0 // pred_check
    %p21 = pneg %p20
  $region23: #{toy_model_forward.1} parent=0 // pred_check_branch
    %23 = sbr.rel (%p21) target = $region25
  $region24: #{toy_model_forward.1} parent=0 // pred_region
    %24 = vst [vmem:[#allocation2] sm:$0xff] 0.0
    %25 = vst [vmem:[#allocation2 + $0x8] sm:$0xff] 0.0
    %26 = vst [vmem:[#allocation2 + $0x10] sm:$0xff] 0.0
    %27 = vst [vmem:[#allocation2 + $0x18] sm:$0xff] 0.0
    %28 = vst [vmem:[#allocation2 + $0x20] sm:$0xff] 0.0
    %29 = vst [vmem:[#allocation2 + $0x28] sm:$0xff] 0.0
    %30 = vst [vmem:[#allocation2 + $0x30] sm:$0xff] 0.0
    %31 = vst [vmem:[#allocation2 + $0x38] sm:$0xff] 0.0
    %32 = vst [vmem:[#allocation2 + $0x40] sm:$0xff] 0.0
    %33 = vst [vmem:[#allocation2 + $0x48] sm:$0xff] 0.0
    %34 = vst [vmem:[#allocation2 + $0x50] sm:$0xff] 0.0
    %35 = vst [vmem:[#allocation2 + $0x58] sm:$0xff] 0.0
    %36 = vst [vmem:[#allocation2 + $0x60] sm:$0xff] 0.0
    %37 = vst [vmem:[#allocation2 + $0x68] sm:$0xff] 0.0
    %38 = vst [vmem:[#allocation2 + $0x70] sm:$0xff] 0.0
    %39 = vst [vmem:[#allocation2 + $0x78] sm:$0xff] 0.0
  $region25: #{toy_model_forward.1} parent=0 // pred_fallthru
    _
  %v40 = vld [vmem:[%s0] sm:$0xff]
  %v41 = vld [vmem:[%s0 + $0x8] sm:$0xff]
  %v42 = vld [vmem:[%s0 + $0x10] sm:$0xff]
  %v43 = vld [vmem:[%s0 + $0x18] sm:$0xff]
  %v44 = vld [vmem:[%s0 + $0x20] sm:$0xff]
  %v45 = vld [vmem:[%s0 + $0x28] sm:$0xff]
  %v46 = vld [vmem:[%s0 + $0x30] sm:$0xff]
  %v47 = vld [vmem:[%s0 + $0x38] sm:$0xff]
  %v48 = vld [vmem:[%s0 + $0x40] sm:$0xff]
  %v49 = vld [vmem:[%s0 + $0x48] sm:$0xff]
  %v50 = vld [vmem:[%s0 + $0x50] sm:$0xff]
  %v51 = vld [vmem:[%s0 + $0x58] sm:$0xff]
  %v52 = vld [vmem:[%s0 + $0x60] sm:$0xff]
  %v53 = vld [vmem:[%s0 + $0x68] sm:$0xff]
  %v54 = vld [vmem:[%s0 + $0x70] sm:$0xff]
  %v55 = vld [vmem:[%s0 + $0x78] sm:$0xff]
  %v56 = vld [vmem:[%s0 + $0x80] sm:$0xff]
  %v57 = vld [vmem:[%s0 + $0x88] sm:$0xff]
  %v58 = vld [vmem:[%s0 + $0x90] sm:$0xff]
  %v59 = vld [vmem:[%s0 + $0x98] sm:$0xff]
  %v60 = vld [vmem:[%s0 + $0xa0] sm:$0xff]
  %v61 = vld [vmem:[%s0 + $0xa8] sm:$0xff]
  %v62 = vld [vmem:[%s0 + $0xb0] sm:$0xff]
  %v63 = vld [vmem:[%s0 + $0xb8] sm:$0xff]
  %v64 = vld [vmem:[%s0 + $0xc0] sm:$0xff]
  %v65 = vld [vmem:[%s0 + $0xc8] sm:$0xff]
  %v66 = vld [vmem:[%s0 + $0xd0] sm:$0xff]
  %v67 = vld [vmem:[%s0 + $0xd8] sm:$0xff]
  %v68 = vld [vmem:[%s0 + $0xe0] sm:$0xff]
  %v69 = vld [vmem:[%s0 + $0xe8] sm:$0xff]
  %v70 = vld [vmem:[%s0 + $0xf0] sm:$0xff]
  %v71 = vld [vmem:[%s0 + $0xf8] sm:$0xff]
  %v72 = vld [vmem:[%s1] sm:$0xff]
  %v73 = vld [vmem:[%s1 + $0x8] sm:$0xff]
  %v74 = vld [vmem:[%s1 + $0x10] sm:$0xff]
  %v75 = vld [vmem:[%s1 + $0x18] sm:$0xff]
  %v76 = vld [vmem:[%s1 + $0x20] sm:$0xff]
  %v77 = vld [vmem:[%s1 + $0x28] sm:$0xff]
  %v78 = vld [vmem:[%s1 + $0x30] sm:$0xff]
  %v79 = vld [vmem:[%s1 + $0x38] sm:$0xff]
  %v80 = vld [vmem:[%s1 + $0x40] sm:$0xff]
  %v81 = vld [vmem:[%s1 + $0x48] sm:$0xff]
  %v82 = vld [vmem:[%s1 + $0x50] sm:$0xff]
  %v83 = vld [vmem:[%s1 + $0x58] sm:$0xff]
  %v84 = vld [vmem:[%s1 + $0x60] sm:$0xff]
  %v85 = vld [vmem:[%s1 + $0x68] sm:$0xff]
  %v86 = vld [vmem:[%s1 + $0x70] sm:$0xff]
  %v87 = vld [vmem:[%s1 + $0x78] sm:$0xff]
  %v88 = vld [vmem:[%s1 + $0x80] sm:$0xff]
  %v89 = vld [vmem:[%s1 + $0x88] sm:$0xff]
  %v90 = vld [vmem:[%s1 + $0x90] sm:$0xff]
  %v91 = vld [vmem:[%s1 + $0x98] sm:$0xff]
  %v92 = vld [vmem:[%s1 + $0xa0] sm:$0xff]
  %v93 = vld [vmem:[%s1 + $0xa8] sm:$0xff]
  %v94 = vld [vmem:[%s1 + $0xb0] sm:$0xff]
  %v95 = vld [vmem:[%s1 + $0xb8] sm:$0xff]
  %v96 = vld [vmem:[%s1 + $0xc0] sm:$0xff]
  %v97 = vld [vmem:[%s1 + $0xc8] sm:$0xff]
  %v98 = vld [vmem:[%s1 + $0xd0] sm:$0xff]
  %v99 = vld [vmem:[%s1 + $0xd8] sm:$0xff]
  %v100 = vld [vmem:[%s1 + $0xe0] sm:$0xff]
  %v101 = vld [vmem:[%s1 + $0xe8] sm:$0xff]
  %v102 = vld [vmem:[%s1 + $0xf0] sm:$0xff]
  %v103 = vld [vmem:[%s1 + $0xf8] sm:$0xff]
  %v104 = vld [vmem:[%s1 + $0x100] sm:$0xff]
  %v105 = vld [vmem:[%s1 + $0x108] sm:$0xff]
  %v106 = vld [vmem:[%s1 + $0x110] sm:$0xff]
  %v107 = vld [vmem:[%s1 + $0x118] sm:$0xff]
  %v108 = vld [vmem:[%s1 + $0x120] sm:$0xff]
  %v109 = vld [vmem:[%s1 + $0x128] sm:$0xff]
  %v110 = vld [vmem:[%s1 + $0x130] sm:$0xff]
  %v111 = vld [vmem:[%s1 + $0x138] sm:$0xff]
  %v112 = vld [vmem:[%s1 + $0x140] sm:$0xff]
  %v113 = vld [vmem:[%s1 + $0x148] sm:$0xff]
  %v114 = vld [vmem:[%s1 + $0x150] sm:$0xff]
  %v115 = vld [vmem:[%s1 + $0x158] sm:$0xff]
  %v116 = vld [vmem:[%s1 + $0x160] sm:$0xff]
  %v117 = vld [vmem:[%s1 + $0x168] sm:$0xff]
  %v118 = vld [vmem:[%s1 + $0x170] sm:$0xff]
  %v119 = vld [vmem:[%s1 + $0x178] sm:$0xff]
  %v120 = vld [vmem:[%s1 + $0x180] sm:$0xff]
  %v121 = vld [vmem:[%s1 + $0x188] sm:$0xff]
  %v122 = vld [vmem:[%s1 + $0x190] sm:$0xff]
  %v123 = vld [vmem:[%s1 + $0x198] sm:$0xff]
  %v124 = vld [vmem:[%s1 + $0x1a0] sm:$0xff]
  %v125 = vld [vmem:[%s1 + $0x1a8] sm:$0xff]
  %v126 = vld [vmem:[%s1 + $0x1b0] sm:$0xff]
  %v127 = vld [vmem:[%s1 + $0x1b8] sm:$0xff]
  %v128 = vld [vmem:[%s1 + $0x1c0] sm:$0xff]
  %v129 = vld [vmem:[%s1 + $0x1c8] sm:$0xff]
  %v130 = vld [vmem:[%s1 + $0x1d0] sm:$0xff]
  %v131 = vld [vmem:[%s1 + $0x1d8] sm:$0xff]
  %v132 = vld [vmem:[%s1 + $0x1e0] sm:$0xff]
  %v133 = vld [vmem:[%s1 + $0x1e8] sm:$0xff]
  %v134 = vld [vmem:[%s1 + $0x1f0] sm:$0xff]
  %v135 = vld [vmem:[%s1 + $0x1f8] sm:$0xff]
  %v136 = vld [vmem:[%s1 + $0x200] sm:$0xff]
  %v137 = vld [vmem:[%s1 + $0x208] sm:$0xff]
  %v138 = vld [vmem:[%s1 + $0x210] sm:$0xff]
  %v139 = vld [vmem:[%s1 + $0x218] sm:$0xff]
  %v140 = vld [vmem:[%s1 + $0x220] sm:$0xff]
  %v141 = vld [vmem:[%s1 + $0x228] sm:$0xff]
  %v142 = vld [vmem:[%s1 + $0x230] sm:$0xff]
  %v143 = vld [vmem:[%s1 + $0x238] sm:$0xff]
  %v144 = vld [vmem:[%s1 + $0x240] sm:$0xff]
  %v145 = vld [vmem:[%s1 + $0x248] sm:$0xff]
  %v146 = vld [vmem:[%s1 + $0x250] sm:$0xff]
  %v147 = vld [vmem:[%s1 + $0x258] sm:$0xff]
  %v148 = vld [vmem:[%s1 + $0x260] sm:$0xff]
  %v149 = vld [vmem:[%s1 + $0x268] sm:$0xff]
  %v150 = vld [vmem:[%s1 + $0x270] sm:$0xff]
  %v151 = vld [vmem:[%s1 + $0x278] sm:$0xff]
  %v152 = vld [vmem:[%s1 + $0x280] sm:$0xff]
  %v153 = vld [vmem:[%s1 + $0x288] sm:$0xff]
  %v154 = vld [vmem:[%s1 + $0x290] sm:$0xff]
  %v155 = vld [vmem:[%s1 + $0x298] sm:$0xff]
  %v156 = vld [vmem:[%s1 + $0x2a0] sm:$0xff]
  %v157 = vld [vmem:[%s1 + $0x2a8] sm:$0xff]
  %v158 = vld [vmem:[%s1 + $0x2b0] sm:$0xff]
  %v159 = vld [vmem:[%s1 + $0x2b8] sm:$0xff]
  %v160 = vld [vmem:[%s1 + $0x2c0] sm:$0xff]
  %v161 = vld [vmem:[%s1 + $0x2c8] sm:$0xff]
  %v162 = vld [vmem:[%s1 + $0x2d0] sm:$0xff]
  %v163 = vld [vmem:[%s1 + $0x2d8] sm:$0xff]
  %v164 = vld [vmem:[%s1 + $0x2e0] sm:$0xff]
  %v165 = vld [vmem:[%s1 + $0x2e8] sm:$0xff]
  %v166 = vld [vmem:[%s1 + $0x2f0] sm:$0xff]
  %v167 = vld [vmem:[%s1 + $0x2f8] sm:$0xff]
  %v168 = vld [vmem:[%s1 + $0x300] sm:$0xff]
  %v169 = vld [vmem:[%s1 + $0x308] sm:$0xff]
  %v170 = vld [vmem:[%s1 + $0x310] sm:$0xff]
  %v171 = vld [vmem:[%s1 + $0x318] sm:$0xff]
  %v172 = vld [vmem:[%s1 + $0x320] sm:$0xff]
  %v173 = vld [vmem:[%s1 + $0x328] sm:$0xff]
  %v174 = vld [vmem:[%s1 + $0x330] sm:$0xff]
  %v175 = vld [vmem:[%s1 + $0x338] sm:$0xff]
  %v176 = vld [vmem:[%s1 + $0x340] sm:$0xff]
  %v177 = vld [vmem:[%s1 + $0x348] sm:$0xff]
  %v178 = vld [vmem:[%s1 + $0x350] sm:$0xff]
  %v179 = vld [vmem:[%s1 + $0x358] sm:$0xff]
  %v180 = vld [vmem:[%s1 + $0x360] sm:$0xff]
  %v181 = vld [vmem:[%s1 + $0x368] sm:$0xff]
  %v182 = vld [vmem:[%s1 + $0x370] sm:$0xff]
  %v183 = vld [vmem:[%s1 + $0x378] sm:$0xff]
  %v184 = vld [vmem:[%s1 + $0x380] sm:$0xff]
  %v185 = vld [vmem:[%s1 + $0x388] sm:$0xff]
  %v186 = vld [vmem:[%s1 + $0x390] sm:$0xff]
  %v187 = vld [vmem:[%s1 + $0x398] sm:$0xff]
  %v188 = vld [vmem:[%s1 + $0x3a0] sm:$0xff]
  %v189 = vld [vmem:[%s1 + $0x3a8] sm:$0xff]
  %v190 = vld [vmem:[%s1 + $0x3b0] sm:$0xff]
  %v191 = vld [vmem:[%s1 + $0x3b8] sm:$0xff]
  %v192 = vld [vmem:[%s1 + $0x3c0] sm:$0xff]
  %v193 = vld [vmem:[%s1 + $0x3c8] sm:$0xff]
  %v194 = vld [vmem:[%s1 + $0x3d0] sm:$0xff]
  %v195 = vld [vmem:[%s1 + $0x3d8] sm:$0xff]
  %v196 = vld [vmem:[%s1 + $0x3e0] sm:$0xff]
  %v197 = vld [vmem:[%s1 + $0x3e8] sm:$0xff]
  %v198 = vld [vmem:[%s1 + $0x3f0] sm:$0xff]
  %v199 = vld [vmem:[%s1 + $0x3f8] sm:$0xff]
  %v200 = vld [vmem:[%s2] sm:$0xf]
  %v202 = vperm.slane %v200, 0
  %v203 = vperm.slane %v200, 1
  %v204 = vperm.slane %v200, 2
  %v205 = vperm.slane %v200, 3
  %v242 = vunpack.c.l.b16 %v40
  %v243 = vunpack.c.h.b16 %v40
  %v244 = vunpack.c.l.b16 %v41
  %v245 = vunpack.c.h.b16 %v41
  %v246 = vunpack.c.l.b16 %v42
  %v247 = vunpack.c.h.b16 %v42
  %v248 = vunpack.c.l.b16 %v43
  %v249 = vunpack.c.h.b16 %v43
  %v250 = vunpack.c.l.b16 %v44
  %v251 = vunpack.c.h.b16 %v44
  %v252 = vunpack.c.l.b16 %v45
  %v253 = vunpack.c.h.b16 %v45
  %v254 = vunpack.c.l.b16 %v46
  %v255 = vunpack.c.h.b16 %v46
  %v256 = vunpack.c.l.b16 %v47
  %v257 = vunpack.c.h.b16 %v47
  %v258 = vunpack.c.l.b16 %v48
  %v259 = vunpack.c.h.b16 %v48
  %v260 = vunpack.c.l.b16 %v49
  %v261 = vunpack.c.h.b16 %v49
  %v262 = vunpack.c.l.b16 %v50
  %v263 = vunpack.c.h.b16 %v50
  %v264 = vunpack.c.l.b16 %v51
  %v265 = vunpack.c.h.b16 %v51
  %v266 = vunpack.c.l.b16 %v52
  %v267 = vunpack.c.h.b16 %v52
  %v268 = vunpack.c.l.b16 %v53
  %v269 = vunpack.c.h.b16 %v53
  %v270 = vunpack.c.l.b16 %v54
  %v271 = vunpack.c.h.b16 %v54
  %v272 = vunpack.c.l.b16 %v55
  %v273 = vunpack.c.h.b16 %v55
  %v274 = vunpack.c.l.b16 %v56
  %v275 = vunpack.c.h.b16 %v56
  %v276 = vunpack.c.l.b16 %v57
  %v277 = vunpack.c.h.b16 %v57
  %v278 = vunpack.c.l.b16 %v58
  %v279 = vunpack.c.h.b16 %v58
  %v280 = vunpack.c.l.b16 %v59
  %v281 = vunpack.c.h.b16 %v59
  %v282 = vunpack.c.l.b16 %v60
  %v283 = vunpack.c.h.b16 %v60
  %v284 = vunpack.c.l.b16 %v61
  %v285 = vunpack.c.h.b16 %v61
  %v286 = vunpack.c.l.b16 %v62
  %v287 = vunpack.c.h.b16 %v62
  %v288 = vunpack.c.l.b16 %v63
  %v289 = vunpack.c.h.b16 %v63
  %v290 = vunpack.c.l.b16 %v64
  %v291 = vunpack.c.h.b16 %v64
  %v292 = vunpack.c.l.b16 %v65
  %v293 = vunpack.c.h.b16 %v65
  %v294 = vunpack.c.l.b16 %v66
  %v295 = vunpack.c.h.b16 %v66
  %v296 = vunpack.c.l.b16 %v67
  %v297 = vunpack.c.h.b16 %v67
  %v298 = vunpack.c.l.b16 %v68
  %v299 = vunpack.c.h.b16 %v68
  %v300 = vunpack.c.l.b16 %v69
  %v301 = vunpack.c.h.b16 %v69
  %v302 = vunpack.c.l.b16 %v70
  %v303 = vunpack.c.h.b16 %v70
  %v304 = vunpack.c.l.b16 %v71
  %v305 = vunpack.c.h.b16 %v71
  %v306 = vpack.c.b16 %v246, %v242
  %v307 = vpack.c.b16 %v247, %v243
  %v308 = vpack.c.b16 %v248, %v244
  %v309 = vpack.c.b16 %v249, %v245
  %v310 = vpack.c.b16 %v254, %v250
  %v311 = vpack.c.b16 %v255, %v251
  %v312 = vpack.c.b16 %v256, %v252
  %v313 = vpack.c.b16 %v257, %v253
  %v314 = vpack.c.b16 %v262, %v258
  %v315 = vpack.c.b16 %v263, %v259
  %v316 = vpack.c.b16 %v264, %v260
  %v317 = vpack.c.b16 %v265, %v261
  %v318 = vpack.c.b16 %v270, %v266
  %v319 = vpack.c.b16 %v271, %v267
  %v320 = vpack.c.b16 %v272, %v268
  %v321 = vpack.c.b16 %v273, %v269
  %v322 = vpack.c.b16 %v278, %v274
  %v323 = vpack.c.b16 %v279, %v275
  %v324 = vpack.c.b16 %v280, %v276
  %v325 = vpack.c.b16 %v281, %v277
  %v326 = vpack.c.b16 %v286, %v282
  %v327 = vpack.c.b16 %v287, %v283
  %v328 = vpack.c.b16 %v288, %v284
  %v329 = vpack.c.b16 %v289, %v285
  %v330 = vpack.c.b16 %v294, %v290
  %v331 = vpack.c.b16 %v295, %v291
  %v332 = vpack.c.b16 %v296, %v292
  %v333 = vpack.c.b16 %v297, %v293
  %v334 = vpack.c.b16 %v302, %v298
  %v335 = vpack.c.b16 %v303, %v299
  %v336 = vpack.c.b16 %v304, %v300
  %v337 = vpack.c.b16 %v305, %v301
  %v498 = vunpack.c.l.b16 %v72
  %v499 = vunpack.c.h.b16 %v72
  %v500 = vunpack.c.l.b16 %v73
  %v501 = vunpack.c.h.b16 %v73
  %v502 = vunpack.c.l.b16 %v74
  %v503 = vunpack.c.h.b16 %v74
  %v504 = vunpack.c.l.b16 %v75
  %v505 = vunpack.c.h.b16 %v75
  %v506 = vunpack.c.l.b16 %v76
  %v507 = vunpack.c.h.b16 %v76
  %v508 = vunpack.c.l.b16 %v77
  %v509 = vunpack.c.h.b16 %v77
  %v510 = vunpack.c.l.b16 %v78
  %v511 = vunpack.c.h.b16 %v78
  %v512 = vunpack.c.l.b16 %v79
  %v513 = vunpack.c.h.b16 %v79
  %v514 = vunpack.c.l.b16 %v80
  %v515 = vunpack.c.h.b16 %v80
  %v516 = vunpack.c.l.b16 %v81
  %v517 = vunpack.c.h.b16 %v81
  %v518 = vunpack.c.l.b16 %v82
  %v519 = vunpack.c.h.b16 %v82
  %v520 = vunpack.c.l.b16 %v83
  %v521 = vunpack.c.h.b16 %v83
  %v522 = vunpack.c.l.b16 %v84
  %v523 = vunpack.c.h.b16 %v84
  %v524 = vunpack.c.l.b16 %v85
  %v525 = vunpack.c.h.b16 %v85
  %v526 = vunpack.c.l.b16 %v86
  %v527 = vunpack.c.h.b16 %v86
  %v528 = vunpack.c.l.b16 %v87
  %v529 = vunpack.c.h.b16 %v87
  %v530 = vunpack.c.l.b16 %v88
  %v531 = vunpack.c.h.b16 %v88
  %v532 = vunpack.c.l.b16 %v89
  %v533 = vunpack.c.h.b16 %v89
  %v534 = vunpack.c.l.b16 %v90
  %v535 = vunpack.c.h.b16 %v90
  %v536 = vunpack.c.l.b16 %v91
  %v537 = vunpack.c.h.b16 %v91
  %v538 = vunpack.c.l.b16 %v92
  %v539 = vunpack.c.h.b16 %v92
  %v540 = vunpack.c.l.b16 %v93
  %v541 = vunpack.c.h.b16 %v93
  %v542 = vunpack.c.l.b16 %v94
  %v543 = vunpack.c.h.b16 %v94
  %v544 = vunpack.c.l.b16 %v95
  %v545 = vunpack.c.h.b16 %v95
  %v546 = vunpack.c.l.b16 %v96
  %v547 = vunpack.c.h.b16 %v96
  %v548 = vunpack.c.l.b16 %v97
  %v549 = vunpack.c.h.b16 %v97
  %v550 = vunpack.c.l.b16 %v98
  %v551 = vunpack.c.h.b16 %v98
  %v552 = vunpack.c.l.b16 %v99
  %v553 = vunpack.c.h.b16 %v99
  %v554 = vunpack.c.l.b16 %v100
  %v555 = vunpack.c.h.b16 %v100
  %v556 = vunpack.c.l.b16 %v101
  %v557 = vunpack.c.h.b16 %v101
  %v558 = vunpack.c.l.b16 %v102
  %v559 = vunpack.c.h.b16 %v102
  %v560 = vunpack.c.l.b16 %v103
  %v561 = vunpack.c.h.b16 %v103
  %v562 = vunpack.c.l.b16 %v104
  %v563 = vunpack.c.h.b16 %v104
  %v564 = vunpack.c.l.b16 %v105
  %v565 = vunpack.c.h.b16 %v105
  %v566 = vunpack.c.l.b16 %v106
  %v567 = vunpack.c.h.b16 %v106
  %v568 = vunpack.c.l.b16 %v107
  %v569 = vunpack.c.h.b16 %v107
  %v570 = vunpack.c.l.b16 %v108
  %v571 = vunpack.c.h.b16 %v108
  %v572 = vunpack.c.l.b16 %v109
  %v573 = vunpack.c.h.b16 %v109
  %v574 = vunpack.c.l.b16 %v110
  %v575 = vunpack.c.h.b16 %v110
  %v576 = vunpack.c.l.b16 %v111
  %v577 = vunpack.c.h.b16 %v111
  %v578 = vunpack.c.l.b16 %v112
  %v579 = vunpack.c.h.b16 %v112
  %v580 = vunpack.c.l.b16 %v113
  %v581 = vunpack.c.h.b16 %v113
  %v582 = vunpack.c.l.b16 %v114
  %v583 = vunpack.c.h.b16 %v114
  %v584 = vunpack.c.l.b16 %v115
  %v585 = vunpack.c.h.b16 %v115
  %v586 = vunpack.c.l.b16 %v116
  %v587 = vunpack.c.h.b16 %v116
  %v588 = vunpack.c.l.b16 %v117
  %v589 = vunpack.c.h.b16 %v117
  %v590 = vunpack.c.l.b16 %v118
  %v591 = vunpack.c.h.b16 %v118
  %v592 = vunpack.c.l.b16 %v119
  %v593 = vunpack.c.h.b16 %v119
  %v594 = vunpack.c.l.b16 %v120
  %v595 = vunpack.c.h.b16 %v120
  %v596 = vunpack.c.l.b16 %v121
  %v597 = vunpack.c.h.b16 %v121
  %v598 = vunpack.c.l.b16 %v122
  %v599 = vunpack.c.h.b16 %v122
  %v600 = vunpack.c.l.b16 %v123
  %v601 = vunpack.c.h.b16 %v123
  %v602 = vunpack.c.l.b16 %v124
  %v603 = vunpack.c.h.b16 %v124
  %v604 = vunpack.c.l.b16 %v125
  %v605 = vunpack.c.h.b16 %v125
  %v606 = vunpack.c.l.b16 %v126
  %v607 = vunpack.c.h.b16 %v126
  %v608 = vunpack.c.l.b16 %v127
  %v609 = vunpack.c.h.b16 %v127
  %v610 = vunpack.c.l.b16 %v128
  %v611 = vunpack.c.h.b16 %v128
  %v612 = vunpack.c.l.b16 %v129
  %v613 = vunpack.c.h.b16 %v129
  %v614 = vunpack.c.l.b16 %v130
  %v615 = vunpack.c.h.b16 %v130
  %v616 = vunpack.c.l.b16 %v131
  %v617 = vunpack.c.h.b16 %v131
  %v618 = vunpack.c.l.b16 %v132
  %v619 = vunpack.c.h.b16 %v132
  %v620 = vunpack.c.l.b16 %v133
  %v621 = vunpack.c.h.b16 %v133
  %v622 = vunpack.c.l.b16 %v134
  %v623 = vunpack.c.h.b16 %v134
  %v624 = vunpack.c.l.b16 %v135
  %v625 = vunpack.c.h.b16 %v135
  %v626 = vunpack.c.l.b16 %v136
  %v627 = vunpack.c.h.b16 %v136
  %v628 = vunpack.c.l.b16 %v137
  %v629 = vunpack.c.h.b16 %v137
  %v630 = vunpack.c.l.b16 %v138
  %v631 = vunpack.c.h.b16 %v138
  %v632 = vunpack.c.l.b16 %v139
  %v633 = vunpack.c.h.b16 %v139
  %v634 = vunpack.c.l.b16 %v140
  %v635 = vunpack.c.h.b16 %v140
  %v636 = vunpack.c.l.b16 %v141
  %v637 = vunpack.c.h.b16 %v141
  %v638 = vunpack.c.l.b16 %v142
  %v639 = vunpack.c.h.b16 %v142
  %v640 = vunpack.c.l.b16 %v143
  %v641 = vunpack.c.h.b16 %v143
  %v642 = vunpack.c.l.b16 %v144
  %v643 = vunpack.c.h.b16 %v144
  %v644 = vunpack.c.l.b16 %v145
  %v645 = vunpack.c.h.b16 %v145
  %v646 = vunpack.c.l.b16 %v146
  %v647 = vunpack.c.h.b16 %v146
  %v648 = vunpack.c.l.b16 %v147
  %v649 = vunpack.c.h.b16 %v147
  %v650 = vunpack.c.l.b16 %v148
  %v651 = vunpack.c.h.b16 %v148
  %v652 = vunpack.c.l.b16 %v149
  %v653 = vunpack.c.h.b16 %v149
  %v654 = vunpack.c.l.b16 %v150
  %v655 = vunpack.c.h.b16 %v150
  %v656 = vunpack.c.l.b16 %v151
  %v657 = vunpack.c.h.b16 %v151
  %v658 = vunpack.c.l.b16 %v152
  %v659 = vunpack.c.h.b16 %v152
  %v660 = vunpack.c.l.b16 %v153
  %v661 = vunpack.c.h.b16 %v153
  %v662 = vunpack.c.l.b16 %v154
  %v663 = vunpack.c.h.b16 %v154
  %v664 = vunpack.c.l.b16 %v155
  %v665 = vunpack.c.h.b16 %v155
  %v666 = vunpack.c.l.b16 %v156
  %v667 = vunpack.c.h.b16 %v156
  %v668 = vunpack.c.l.b16 %v157
  %v669 = vunpack.c.h.b16 %v157
  %v670 = vunpack.c.l.b16 %v158
  %v671 = vunpack.c.h.b16 %v158
  %v672 = vunpack.c.l.b16 %v159
  %v673 = vunpack.c.h.b16 %v159
  %v674 = vunpack.c.l.b16 %v160
  %v675 = vunpack.c.h.b16 %v160
  %v676 = vunpack.c.l.b16 %v161
  %v677 = vunpack.c.h.b16 %v161
  %v678 = vunpack.c.l.b16 %v162
  %v679 = vunpack.c.h.b16 %v162
  %v680 = vunpack.c.l.b16 %v163
  %v681 = vunpack.c.h.b16 %v163
  %v682 = vunpack.c.l.b16 %v164
  %v683 = vunpack.c.h.b16 %v164
  %v684 = vunpack.c.l.b16 %v165
  %v685 = vunpack.c.h.b16 %v165
  %v686 = vunpack.c.l.b16 %v166
  %v687 = vunpack.c.h.b16 %v166
  %v688 = vunpack.c.l.b16 %v167
  %v689 = vunpack.c.h.b16 %v167
  %v690 = vunpack.c.l.b16 %v168
  %v691 = vunpack.c.h.b16 %v168
  %v692 = vunpack.c.l.b16 %v169
  %v693 = vunpack.c.h.b16 %v169
  %v694 = vunpack.c.l.b16 %v170
  %v695 = vunpack.c.h.b16 %v170
  %v696 = vunpack.c.l.b16 %v171
  %v697 = vunpack.c.h.b16 %v171
  %v698 = vunpack.c.l.b16 %v172
  %v699 = vunpack.c.h.b16 %v172
  %v700 = vunpack.c.l.b16 %v173
  %v701 = vunpack.c.h.b16 %v173
  %v702 = vunpack.c.l.b16 %v174
  %v703 = vunpack.c.h.b16 %v174
  %v704 = vunpack.c.l.b16 %v175
  %v705 = vunpack.c.h.b16 %v175
  %v706 = vunpack.c.l.b16 %v176
  %v707 = vunpack.c.h.b16 %v176
  %v708 = vunpack.c.l.b16 %v177
  %v709 = vunpack.c.h.b16 %v177
  %v710 = vunpack.c.l.b16 %v178
  %v711 = vunpack.c.h.b16 %v178
  %v712 = vunpack.c.l.b16 %v179
  %v713 = vunpack.c.h.b16 %v179
  %v714 = vunpack.c.l.b16 %v180
  %v715 = vunpack.c.h.b16 %v180
  %v716 = vunpack.c.l.b16 %v181
  %v717 = vunpack.c.h.b16 %v181
  %v718 = vunpack.c.l.b16 %v182
  %v719 = vunpack.c.h.b16 %v182
  %v720 = vunpack.c.l.b16 %v183
  %v721 = vunpack.c.h.b16 %v183
  %v722 = vunpack.c.l.b16 %v184
  %v723 = vunpack.c.h.b16 %v184
  %v724 = vunpack.c.l.b16 %v185
  %v725 = vunpack.c.h.b16 %v185
  %v726 = vunpack.c.l.b16 %v186
  %v727 = vunpack.c.h.b16 %v186
  %v728 = vunpack.c.l.b16 %v187
  %v729 = vunpack.c.h.b16 %v187
  %v730 = vunpack.c.l.b16 %v188
  %v731 = vunpack.c.h.b16 %v188
  %v732 = vunpack.c.l.b16 %v189
  %v733 = vunpack.c.h.b16 %v189
  %v734 = vunpack.c.l.b16 %v190
  %v735 = vunpack.c.h.b16 %v190
  %v736 = vunpack.c.l.b16 %v191
  %v737 = vunpack.c.h.b16 %v191
  %v738 = vunpack.c.l.b16 %v192
  %v739 = vunpack.c.h.b16 %v192
  %v740 = vunpack.c.l.b16 %v193
  %v741 = vunpack.c.h.b16 %v193
  %v742 = vunpack.c.l.b16 %v194
  %v743 = vunpack.c.h.b16 %v194
  %v744 = vunpack.c.l.b16 %v195
  %v745 = vunpack.c.h.b16 %v195
  %v746 = vunpack.c.l.b16 %v196
  %v747 = vunpack.c.h.b16 %v196
  %v748 = vunpack.c.l.b16 %v197
  %v749 = vunpack.c.h.b16 %v197
  %v750 = vunpack.c.l.b16 %v198
  %v751 = vunpack.c.h.b16 %v198
  %v752 = vunpack.c.l.b16 %v199
  %v753 = vunpack.c.h.b16 %v199
  %v754 = vpack.c.b16 %v502, %v498
  %v755 = vpack.c.b16 %v503, %v499
  %v756 = vpack.c.b16 %v504, %v500
  %v757 = vpack.c.b16 %v505, %v501
  %v758 = vpack.c.b16 %v510, %v506
  %v759 = vpack.c.b16 %v511, %v507
  %v760 = vpack.c.b16 %v512, %v508
  %v761 = vpack.c.b16 %v513, %v509
  %v762 = vpack.c.b16 %v518, %v514
  %v763 = vpack.c.b16 %v519, %v515
  %v764 = vpack.c.b16 %v520, %v516
  %v765 = vpack.c.b16 %v521, %v517
  %v766 = vpack.c.b16 %v526, %v522
  %v767 = vpack.c.b16 %v527, %v523
  %v768 = vpack.c.b16 %v528, %v524
  %v769 = vpack.c.b16 %v529, %v525
  %v770 = vpack.c.b16 %v534, %v530
  %v771 = vpack.c.b16 %v535, %v531
  %v772 = vpack.c.b16 %v536, %v532
  %v773 = vpack.c.b16 %v537, %v533
  %v774 = vpack.c.b16 %v542, %v538
  %v775 = vpack.c.b16 %v543, %v539
  %v776 = vpack.c.b16 %v544, %v540
  %v777 = vpack.c.b16 %v545, %v541
  %v778 = vpack.c.b16 %v550, %v546
  %v779 = vpack.c.b16 %v551, %v547
  %v780 = vpack.c.b16 %v552, %v548
  %v781 = vpack.c.b16 %v553, %v549
  %v782 = vpack.c.b16 %v558, %v554
  %v783 = vpack.c.b16 %v559, %v555
  %v784 = vpack.c.b16 %v560, %v556
  %v785 = vpack.c.b16 %v561, %v557
  %v786 = vpack.c.b16 %v566, %v562
  %v787 = vpack.c.b16 %v567, %v563
  %v788 = vpack.c.b16 %v568, %v564
  %v789 = vpack.c.b16 %v569, %v565
  %v790 = vpack.c.b16 %v574, %v570
  %v791 = vpack.c.b16 %v575, %v571
  %v792 = vpack.c.b16 %v576, %v572
  %v793 = vpack.c.b16 %v577, %v573
  %v794 = vpack.c.b16 %v582, %v578
  %v795 = vpack.c.b16 %v583, %v579
  %v796 = vpack.c.b16 %v584, %v580
  %v797 = vpack.c.b16 %v585, %v581
  %v798 = vpack.c.b16 %v590, %v586
  %v799 = vpack.c.b16 %v591, %v587
  %v800 = vpack.c.b16 %v592, %v588
  %v801 = vpack.c.b16 %v593, %v589
  %v802 = vpack.c.b16 %v598, %v594
  %v803 = vpack.c.b16 %v599, %v595
  %v804 = vpack.c.b16 %v600, %v596
  %v805 = vpack.c.b16 %v601, %v597
  %v806 = vpack.c.b16 %v606, %v602
  %v807 = vpack.c.b16 %v607, %v603
  %v808 = vpack.c.b16 %v608, %v604
  %v809 = vpack.c.b16 %v609, %v605
  %v810 = vpack.c.b16 %v614, %v610
  %v811 = vpack.c.b16 %v615, %v611
  %v812 = vpack.c.b16 %v616, %v612
  %v813 = vpack.c.b16 %v617, %v613
  %v814 = vpack.c.b16 %v622, %v618
  %v815 = vpack.c.b16 %v623, %v619
  %v816 = vpack.c.b16 %v624, %v620
  %v817 = vpack.c.b16 %v625, %v621
  %v818 = vpack.c.b16 %v630, %v626
  %v819 = vpack.c.b16 %v631, %v627
  %v820 = vpack.c.b16 %v632, %v628
  %v821 = vpack.c.b16 %v633, %v629
  %v822 = vpack.c.b16 %v638, %v634
  %v823 = vpack.c.b16 %v639, %v635
  %v824 = vpack.c.b16 %v640, %v636
  %v825 = vpack.c.b16 %v641, %v637
  %v826 = vpack.c.b16 %v646, %v642
  %v827 = vpack.c.b16 %v647, %v643
  %v828 = vpack.c.b16 %v648, %v644
  %v829 = vpack.c.b16 %v649, %v645
  %v830 = vpack.c.b16 %v654, %v650
  %v831 = vpack.c.b16 %v655, %v651
  %v832 = vpack.c.b16 %v656, %v652
  %v833 = vpack.c.b16 %v657, %v653
  %v834 = vpack.c.b16 %v662, %v658
  %v835 = vpack.c.b16 %v663, %v659
  %v836 = vpack.c.b16 %v664, %v660
  %v837 = vpack.c.b16 %v665, %v661
  %v838 = vpack.c.b16 %v670, %v666
  %v839 = vpack.c.b16 %v671, %v667
  %v840 = vpack.c.b16 %v672, %v668
  %v841 = vpack.c.b16 %v673, %v669
  %v842 = vpack.c.b16 %v678, %v674
  %v843 = vpack.c.b16 %v679, %v675
  %v844 = vpack.c.b16 %v680, %v676
  %v845 = vpack.c.b16 %v681, %v677
  %v846 = vpack.c.b16 %v686, %v682
  %v847 = vpack.c.b16 %v687, %v683
  %v848 = vpack.c.b16 %v688, %v684
  %v849 = vpack.c.b16 %v689, %v685
  %v850 = vpack.c.b16 %v694, %v690
  %v851 = vpack.c.b16 %v695, %v691
  %v852 = vpack.c.b16 %v696, %v692
  %v853 = vpack.c.b16 %v697, %v693
  %v854 = vpack.c.b16 %v702, %v698
  %v855 = vpack.c.b16 %v703, %v699
  %v856 = vpack.c.b16 %v704, %v700
  %v857 = vpack.c.b16 %v705, %v701
  %v858 = vpack.c.b16 %v710, %v706
  %v859 = vpack.c.b16 %v711, %v707
  %v860 = vpack.c.b16 %v712, %v708
  %v861 = vpack.c.b16 %v713, %v709
  %v862 = vpack.c.b16 %v718, %v714
  %v863 = vpack.c.b16 %v719, %v715
  %v864 = vpack.c.b16 %v720, %v716
  %v865 = vpack.c.b16 %v721, %v717
  %v866 = vpack.c.b16 %v726, %v722
  %v867 = vpack.c.b16 %v727, %v723
  %v868 = vpack.c.b16 %v728, %v724
  %v869 = vpack.c.b16 %v729, %v725
  %v870 = vpack.c.b16 %v734, %v730
  %v871 = vpack.c.b16 %v735, %v731
  %v872 = vpack.c.b16 %v736, %v732
  %v873 = vpack.c.b16 %v737, %v733
  %v874 = vpack.c.b16 %v742, %v738
  %v875 = vpack.c.b16 %v743, %v739
  %v876 = vpack.c.b16 %v744, %v740
  %v877 = vpack.c.b16 %v745, %v741
  %v878 = vpack.c.b16 %v750, %v746
  %v879 = vpack.c.b16 %v751, %v747
  %v880 = vpack.c.b16 %v752, %v748
  %v881 = vpack.c.b16 %v753, %v749
  %1010 = vmatpush.bf16.msra.mxu0 %v782
  %1011 = vmatpush.bf16.msra.mxu0 %v778
  %1012 = vmatpush.bf16.msra.mxu0 %v774
  %1013 = vmatpush.bf16.msra.mxu0 %v770
  %1014 = vmatpush.bf16.msra.mxu0 %v766
  %1015 = vmatpush.bf16.msra.mxu0 %v762
  %1016 = vmatpush.bf16.msra.mxu0 %v758
  %1017 = vmatpush.bf16.msra.mxu0 %v754
  %1018 = vmatmul.bf16.gmra.mxu0 %v306
  %v1019 = vpop.f32.mrf.mxu0
  %v1020 = vadd.f32 %v202, %v1019
  %v1021 = vpop.f32.mrf.mxu0
  %v1022 = vadd.f32 %v202, %v1021
  %1023 = vmatmul.bf16.gmra.mxu0 %v310
  %v1024 = vpop.f32.mrf.mxu0
  %v1025 = vadd.f32 %v202, %v1024
  %v1026 = vpop.f32.mrf.mxu0
  %v1027 = vadd.f32 %v202, %v1026
  %1028 = vmatmul.bf16.gmra.mxu0 %v314
  %v1029 = vpop.f32.mrf.mxu0
  %v1030 = vadd.f32 %v202, %v1029
  %v1031 = vpop.f32.mrf.mxu0
  %v1032 = vadd.f32 %v202, %v1031
  %1033 = vmatmul.bf16.gmra.mxu0 %v318
  %v1034 = vpop.f32.mrf.mxu0
  %v1035 = vadd.f32 %v202, %v1034
  %v1036 = vpop.f32.mrf.mxu0
  %v1037 = vadd.f32 %v202, %v1036
  %1038 = vmatmul.bf16.gmra.mxu0 %v322
  %v1039 = vpop.f32.mrf.mxu0
  %v1040 = vadd.f32 %v202, %v1039
  %v1041 = vpop.f32.mrf.mxu0
  %v1042 = vadd.f32 %v202, %v1041
  %1043 = vmatmul.bf16.gmra.mxu0 %v326
  %v1044 = vpop.f32.mrf.mxu0
  %v1045 = vadd.f32 %v202, %v1044
  %v1046 = vpop.f32.mrf.mxu0
  %v1047 = vadd.f32 %v202, %v1046
  %1048 = vmatmul.bf16.gmra.mxu0 %v330
  %v1049 = vpop.f32.mrf.mxu0
  %v1050 = vadd.f32 %v202, %v1049
  %v1051 = vpop.f32.mrf.mxu0
  %v1052 = vadd.f32 %v202, %v1051
  %1053 = vmatmul.bf16.gmra.mxu0 %v334
  %v1054 = vpop.f32.mrf.mxu0
  %v1055 = vadd.f32 %v202, %v1054
  %v1056 = vpop.f32.mrf.mxu0
  %v1057 = vadd.f32 %v202, %v1056
  %1058 = vdwg.mxu0
  %1059 = vmatpush.bf16.msra.mxu0 %v814
  %1060 = vmatpush.bf16.msra.mxu0 %v810
  %1061 = vmatpush.bf16.msra.mxu0 %v806
  %1062 = vmatpush.bf16.msra.mxu0 %v802
  %1063 = vmatpush.bf16.msra.mxu0 %v798
  %1064 = vmatpush.bf16.msra.mxu0 %v794
  %1065 = vmatpush.bf16.msra.mxu0 %v790
  %1066 = vmatpush.bf16.msra.mxu0 %v786
  %1067 = vmatmul.bf16.gmra.mxu0 %v307
  %v1068 = vpop.f32.mrf.mxu0
  %v1069 = vadd.f32 %v1020, %v1068
  %v1070 = vpop.f32.mrf.mxu0
  %v1071 = vadd.f32 %v1022, %v1070
  %1072 = vmatmul.bf16.gmra.mxu0 %v311
  %v1073 = vpop.f32.mrf.mxu0
  %v1074 = vadd.f32 %v1025, %v1073
  %v1075 = vpop.f32.mrf.mxu0
  %v1076 = vadd.f32 %v1027, %v1075
  %1077 = vmatmul.bf16.gmra.mxu0 %v315
  %v1078 = vpop.f32.mrf.mxu0
  %v1079 = vadd.f32 %v1030, %v1078
  %v1080 = vpop.f32.mrf.mxu0
  %v1081 = vadd.f32 %v1032, %v1080
  %1082 = vmatmul.bf16.gmra.mxu0 %v319
  %v1083 = vpop.f32.mrf.mxu0
  %v1084 = vadd.f32 %v1035, %v1083
  %v1085 = vpop.f32.mrf.mxu0
  %v1086 = vadd.f32 %v1037, %v1085
  %1087 = vmatmul.bf16.gmra.mxu0 %v323
  %v1088 = vpop.f32.mrf.mxu0
  %v1089 = vadd.f32 %v1040, %v1088
  %v1090 = vpop.f32.mrf.mxu0
  %v1091 = vadd.f32 %v1042, %v1090
  %1092 = vmatmul.bf16.gmra.mxu0 %v327
  %v1093 = vpop.f32.mrf.mxu0
  %v1094 = vadd.f32 %v1045, %v1093
  %v1095 = vpop.f32.mrf.mxu0
  %v1096 = vadd.f32 %v1047, %v1095
  %1097 = vmatmul.bf16.gmra.mxu0 %v331
  %v1098 = vpop.f32.mrf.mxu0
  %v1099 = vadd.f32 %v1050, %v1098
  %v1100 = vpop.f32.mrf.mxu0
  %v1101 = vadd.f32 %v1052, %v1100
  %1102 = vmatmul.bf16.gmra.mxu0 %v335
  %v1103 = vpop.f32.mrf.mxu0
  %v1104 = vadd.f32 %v1055, %v1103
  %v1105 = vpop.f32.mrf.mxu0
  %v1106 = vadd.f32 %v1057, %v1105
  %1107 = vdwg.mxu0
  %1108 = vmatpush.bf16.msra.mxu0 %v846
  %1109 = vmatpush.bf16.msra.mxu0 %v842
  %1110 = vmatpush.bf16.msra.mxu0 %v838
  %1111 = vmatpush.bf16.msra.mxu0 %v834
  %1112 = vmatpush.bf16.msra.mxu0 %v830
  %1113 = vmatpush.bf16.msra.mxu0 %v826
  %1114 = vmatpush.bf16.msra.mxu0 %v822
  %1115 = vmatpush.bf16.msra.mxu0 %v818
  %1116 = vmatmul.bf16.gmra.mxu0 %v308
  %v1117 = vpop.f32.mrf.mxu0
  %v1118 = vadd.f32 %v1069, %v1117
  %v1119 = vpop.f32.mrf.mxu0
  %v1120 = vadd.f32 %v1071, %v1119
  %1121 = vmatmul.bf16.gmra.mxu0 %v312
  %v1122 = vpop.f32.mrf.mxu0
  %v1123 = vadd.f32 %v1074, %v1122
  %v1124 = vpop.f32.mrf.mxu0
  %v1125 = vadd.f32 %v1076, %v1124
  %1126 = vmatmul.bf16.gmra.mxu0 %v316
  %v1127 = vpop.f32.mrf.mxu0
  %v1128 = vadd.f32 %v1079, %v1127
  %v1129 = vpop.f32.mrf.mxu0
  %v1130 = vadd.f32 %v1081, %v1129
  %1131 = vmatmul.bf16.gmra.mxu0 %v320
  %v1132 = vpop.f32.mrf.mxu0
  %v1133 = vadd.f32 %v1084, %v1132
  %v1134 = vpop.f32.mrf.mxu0
  %v1135 = vadd.f32 %v1086, %v1134
  %1136 = vmatmul.bf16.gmra.mxu0 %v324
  %v1137 = vpop.f32.mrf.mxu0
  %v1138 = vadd.f32 %v1089, %v1137
  %v1139 = vpop.f32.mrf.mxu0
  %v1140 = vadd.f32 %v1091, %v1139
  %1141 = vmatmul.bf16.gmra.mxu0 %v328
  %v1142 = vpop.f32.mrf.mxu0
  %v1143 = vadd.f32 %v1094, %v1142
  %v1144 = vpop.f32.mrf.mxu0
  %v1145 = vadd.f32 %v1096, %v1144
  %1146 = vmatmul.bf16.gmra.mxu0 %v332
  %v1147 = vpop.f32.mrf.mxu0
  %v1148 = vadd.f32 %v1099, %v1147
  %v1149 = vpop.f32.mrf.mxu0
  %v1150 = vadd.f32 %v1101, %v1149
  %1151 = vmatmul.bf16.gmra.mxu0 %v336
  %v1152 = vpop.f32.mrf.mxu0
  %v1153 = vadd.f32 %v1104, %v1152
  %v1154 = vpop.f32.mrf.mxu0
  %v1155 = vadd.f32 %v1106, %v1154
  %1156 = vdwg.mxu0
  %1157 = vmatpush.bf16.msra.mxu0 %v878
  %1158 = vmatpush.bf16.msra.mxu0 %v874
  %1159 = vmatpush.bf16.msra.mxu0 %v870
  %1160 = vmatpush.bf16.msra.mxu0 %v866
  %1161 = vmatpush.bf16.msra.mxu0 %v862
  %1162 = vmatpush.bf16.msra.mxu0 %v858
  %1163 = vmatpush.bf16.msra.mxu0 %v854
  %1164 = vmatpush.bf16.msra.mxu0 %v850
  %1165 = vmatmul.bf16.gmra.mxu0 %v309
  %v1166 = vpop.f32.mrf.mxu0
  %v1167 = vadd.f32 %v1118, %v1166
  %v1168 = vpop.f32.mrf.mxu0
  %v1169 = vadd.f32 %v1120, %v1168
  %1170 = vmatmul.bf16.gmra.mxu0 %v313
  %v1171 = vpop.f32.mrf.mxu0
  %v1172 = vadd.f32 %v1123, %v1171
  %v1173 = vpop.f32.mrf.mxu0
  %v1174 = vadd.f32 %v1125, %v1173
  %1175 = vmatmul.bf16.gmra.mxu0 %v317
  %v1176 = vpop.f32.mrf.mxu0
  %v1177 = vadd.f32 %v1128, %v1176
  %v1178 = vpop.f32.mrf.mxu0
  %v1179 = vadd.f32 %v1130, %v1178
  %1180 = vmatmul.bf16.gmra.mxu0 %v321
  %v1181 = vpop.f32.mrf.mxu0
  %v1182 = vadd.f32 %v1133, %v1181
  %v1183 = vpop.f32.mrf.mxu0
  %v1184 = vadd.f32 %v1135, %v1183
  %1185 = vmatmul.bf16.gmra.mxu0 %v325
  %v1186 = vpop.f32.mrf.mxu0
  %v1187 = vadd.f32 %v1138, %v1186
  %v1188 = vpop.f32.mrf.mxu0
  %v1189 = vadd.f32 %v1140, %v1188
  %1190 = vmatmul.bf16.gmra.mxu0 %v329
  %v1191 = vpop.f32.mrf.mxu0
  %v1192 = vadd.f32 %v1143, %v1191
  %v1193 = vpop.f32.mrf.mxu0
  %v1194 = vadd.f32 %v1145, %v1193
  %1195 = vmatmul.bf16.gmra.mxu0 %v333
  %v1196 = vpop.f32.mrf.mxu0
  %v1197 = vadd.f32 %v1148, %v1196
  %v1198 = vpop.f32.mrf.mxu0
  %v1199 = vadd.f32 %v1150, %v1198
  %1200 = vmatmul.bf16.gmra.mxu0 %v337
  %v1201 = vpop.f32.mrf.mxu0
  %v1202 = vadd.f32 %v1153, %v1201
  %v1203 = vpop.f32.mrf.mxu0
  %v1204 = vadd.f32 %v1155, %v1203
  %1205 = vdwg.mxu0
  %1206 = vmatpush.bf16.msra.mxu0 %v783
  %1207 = vmatpush.bf16.msra.mxu0 %v779
  %1208 = vmatpush.bf16.msra.mxu0 %v775
  %1209 = vmatpush.bf16.msra.mxu0 %v771
  %1210 = vmatpush.bf16.msra.mxu0 %v767
  %1211 = vmatpush.bf16.msra.mxu0 %v763
  %1212 = vmatpush.bf16.msra.mxu0 %v759
  %1213 = vmatpush.bf16.msra.mxu0 %v755
  %1214 = vmatmul.bf16.gmra.mxu0 %v306
  %v1215 = vpop.f32.mrf.mxu0
  %v1216 = vadd.f32 %v203, %v1215
  %v1217 = vpop.f32.mrf.mxu0
  %v1218 = vadd.f32 %v203, %v1217
  %1219 = vmatmul.bf16.gmra.mxu0 %v310
  %v1220 = vpop.f32.mrf.mxu0
  %v1221 = vadd.f32 %v203, %v1220
  %v1222 = vpop.f32.mrf.mxu0
  %v1223 = vadd.f32 %v203, %v1222
  %1224 = vmatmul.bf16.gmra.mxu0 %v314
  %v1225 = vpop.f32.mrf.mxu0
  %v1226 = vadd.f32 %v203, %v1225
  %v1227 = vpop.f32.mrf.mxu0
  %v1228 = vadd.f32 %v203, %v1227
  %1229 = vmatmul.bf16.gmra.mxu0 %v318
  %v1230 = vpop.f32.mrf.mxu0
  %v1231 = vadd.f32 %v203, %v1230
  %v1232 = vpop.f32.mrf.mxu0
  %v1233 = vadd.f32 %v203, %v1232
  %1234 = vmatmul.bf16.gmra.mxu0 %v322
  %v1235 = vpop.f32.mrf.mxu0
  %v1236 = vadd.f32 %v203, %v1235
  %v1237 = vpop.f32.mrf.mxu0
  %v1238 = vadd.f32 %v203, %v1237
  %1239 = vmatmul.bf16.gmra.mxu0 %v326
  %v1240 = vpop.f32.mrf.mxu0
  %v1241 = vadd.f32 %v203, %v1240
  %v1242 = vpop.f32.mrf.mxu0
  %v1243 = vadd.f32 %v203, %v1242
  %1244 = vmatmul.bf16.gmra.mxu0 %v330
  %v1245 = vpop.f32.mrf.mxu0
  %v1246 = vadd.f32 %v203, %v1245
  %v1247 = vpop.f32.mrf.mxu0
  %v1248 = vadd.f32 %v203, %v1247
  %1249 = vmatmul.bf16.gmra.mxu0 %v334
  %v1250 = vpop.f32.mrf.mxu0
  %v1251 = vadd.f32 %v203, %v1250
  %v1252 = vpop.f32.mrf.mxu0
  %v1253 = vadd.f32 %v203, %v1252
  %1254 = vdwg.mxu0
  %1255 = vmatpush.bf16.msra.mxu0 %v815
  %1256 = vmatpush.bf16.msra.mxu0 %v811
  %1257 = vmatpush.bf16.msra.mxu0 %v807
  %1258 = vmatpush.bf16.msra.mxu0 %v803
  %1259 = vmatpush.bf16.msra.mxu0 %v799
  %1260 = vmatpush.bf16.msra.mxu0 %v795
  %1261 = vmatpush.bf16.msra.mxu0 %v791
  %1262 = vmatpush.bf16.msra.mxu0 %v787
  %1263 = vmatmul.bf16.gmra.mxu0 %v307
  %v1264 = vpop.f32.mrf.mxu0
  %v1265 = vadd.f32 %v1216, %v1264
  %v1266 = vpop.f32.mrf.mxu0
  %v1267 = vadd.f32 %v1218, %v1266
  %1268 = vmatmul.bf16.gmra.mxu0 %v311
  %v1269 = vpop.f32.mrf.mxu0
  %v1270 = vadd.f32 %v1221, %v1269
  %v1271 = vpop.f32.mrf.mxu0
  %v1272 = vadd.f32 %v1223, %v1271
  %1273 = vmatmul.bf16.gmra.mxu0 %v315
  %v1274 = vpop.f32.mrf.mxu0
  %v1275 = vadd.f32 %v1226, %v1274
  %v1276 = vpop.f32.mrf.mxu0
  %v1277 = vadd.f32 %v1228, %v1276
  %1278 = vmatmul.bf16.gmra.mxu0 %v319
  %v1279 = vpop.f32.mrf.mxu0
  %v1280 = vadd.f32 %v1231, %v1279
  %v1281 = vpop.f32.mrf.mxu0
  %v1282 = vadd.f32 %v1233, %v1281
  %1283 = vmatmul.bf16.gmra.mxu0 %v323
  %v1284 = vpop.f32.mrf.mxu0
  %v1285 = vadd.f32 %v1236, %v1284
  %v1286 = vpop.f32.mrf.mxu0
  %v1287 = vadd.f32 %v1238, %v1286
  %1288 = vmatmul.bf16.gmra.mxu0 %v327
  %v1289 = vpop.f32.mrf.mxu0
  %v1290 = vadd.f32 %v1241, %v1289
  %v1291 = vpop.f32.mrf.mxu0
  %v1292 = vadd.f32 %v1243, %v1291
  %1293 = vmatmul.bf16.gmra.mxu0 %v331
  %v1294 = vpop.f32.mrf.mxu0
  %v1295 = vadd.f32 %v1246, %v1294
  %v1296 = vpop.f32.mrf.mxu0
  %v1297 = vadd.f32 %v1248, %v1296
  %1298 = vmatmul.bf16.gmra.mxu0 %v335
  %v1299 = vpop.f32.mrf.mxu0
  %v1300 = vadd.f32 %v1251, %v1299
  %v1301 = vpop.f32.mrf.mxu0
  %v1302 = vadd.f32 %v1253, %v1301
  %1303 = vdwg.mxu0
  %1304 = vmatpush.bf16.msra.mxu0 %v847
  %1305 = vmatpush.bf16.msra.mxu0 %v843
  %1306 = vmatpush.bf16.msra.mxu0 %v839
  %1307 = vmatpush.bf16.msra.mxu0 %v835
  %1308 = vmatpush.bf16.msra.mxu0 %v831
  %1309 = vmatpush.bf16.msra.mxu0 %v827
  %1310 = vmatpush.bf16.msra.mxu0 %v823
  %1311 = vmatpush.bf16.msra.mxu0 %v819
  %1312 = vmatmul.bf16.gmra.mxu0 %v308
  %v1313 = vpop.f32.mrf.mxu0
  %v1314 = vadd.f32 %v1265, %v1313
  %v1315 = vpop.f32.mrf.mxu0
  %v1316 = vadd.f32 %v1267, %v1315
  %1317 = vmatmul.bf16.gmra.mxu0 %v312
  %v1318 = vpop.f32.mrf.mxu0
  %v1319 = vadd.f32 %v1270, %v1318
  %v1320 = vpop.f32.mrf.mxu0
  %v1321 = vadd.f32 %v1272, %v1320
  %1322 = vmatmul.bf16.gmra.mxu0 %v316
  %v1323 = vpop.f32.mrf.mxu0
  %v1324 = vadd.f32 %v1275, %v1323
  %v1325 = vpop.f32.mrf.mxu0
  %v1326 = vadd.f32 %v1277, %v1325
  %1327 = vmatmul.bf16.gmra.mxu0 %v320
  %v1328 = vpop.f32.mrf.mxu0
  %v1329 = vadd.f32 %v1280, %v1328
  %v1330 = vpop.f32.mrf.mxu0
  %v1331 = vadd.f32 %v1282, %v1330
  %1332 = vmatmul.bf16.gmra.mxu0 %v324
  %v1333 = vpop.f32.mrf.mxu0
  %v1334 = vadd.f32 %v1285, %v1333
  %v1335 = vpop.f32.mrf.mxu0
  %v1336 = vadd.f32 %v1287, %v1335
  %1337 = vmatmul.bf16.gmra.mxu0 %v328
  %v1338 = vpop.f32.mrf.mxu0
  %v1339 = vadd.f32 %v1290, %v1338
  %v1340 = vpop.f32.mrf.mxu0
  %v1341 = vadd.f32 %v1292, %v1340
  %1342 = vmatmul.bf16.gmra.mxu0 %v332
  %v1343 = vpop.f32.mrf.mxu0
  %v1344 = vadd.f32 %v1295, %v1343
  %v1345 = vpop.f32.mrf.mxu0
  %v1346 = vadd.f32 %v1297, %v1345
  %1347 = vmatmul.bf16.gmra.mxu0 %v336
  %v1348 = vpop.f32.mrf.mxu0
  %v1349 = vadd.f32 %v1300, %v1348
  %v1350 = vpop.f32.mrf.mxu0
  %v1351 = vadd.f32 %v1302, %v1350
  %1352 = vdwg.mxu0
  %1353 = vmatpush.bf16.msra.mxu0 %v879
  %1354 = vmatpush.bf16.msra.mxu0 %v875
  %1355 = vmatpush.bf16.msra.mxu0 %v871
  %1356 = vmatpush.bf16.msra.mxu0 %v867
  %1357 = vmatpush.bf16.msra.mxu0 %v863
  %1358 = vmatpush.bf16.msra.mxu0 %v859
  %1359 = vmatpush.bf16.msra.mxu0 %v855
  %1360 = vmatpush.bf16.msra.mxu0 %v851
  %1361 = vmatmul.bf16.gmra.mxu0 %v309
  %v1362 = vpop.f32.mrf.mxu0
  %v1363 = vadd.f32 %v1314, %v1362
  %v1364 = vpop.f32.mrf.mxu0
  %v1365 = vadd.f32 %v1316, %v1364
  %1366 = vmatmul.bf16.gmra.mxu0 %v313
  %v1367 = vpop.f32.mrf.mxu0
  %v1368 = vadd.f32 %v1319, %v1367
  %v1369 = vpop.f32.mrf.mxu0
  %v1370 = vadd.f32 %v1321, %v1369
  %1371 = vmatmul.bf16.gmra.mxu0 %v317
  %v1372 = vpop.f32.mrf.mxu0
  %v1373 = vadd.f32 %v1324, %v1372
  %v1374 = vpop.f32.mrf.mxu0
  %v1375 = vadd.f32 %v1326, %v1374
  %1376 = vmatmul.bf16.gmra.mxu0 %v321
  %v1377 = vpop.f32.mrf.mxu0
  %v1378 = vadd.f32 %v1329, %v1377
  %v1379 = vpop.f32.mrf.mxu0
  %v1380 = vadd.f32 %v1331, %v1379
  %1381 = vmatmul.bf16.gmra.mxu0 %v325
  %v1382 = vpop.f32.mrf.mxu0
  %v1383 = vadd.f32 %v1334, %v1382
  %v1384 = vpop.f32.mrf.mxu0
  %v1385 = vadd.f32 %v1336, %v1384
  %1386 = vmatmul.bf16.gmra.mxu0 %v329
  %v1387 = vpop.f32.mrf.mxu0
  %v1388 = vadd.f32 %v1339, %v1387
  %v1389 = vpop.f32.mrf.mxu0
  %v1390 = vadd.f32 %v1341, %v1389
  %1391 = vmatmul.bf16.gmra.mxu0 %v333
  %v1392 = vpop.f32.mrf.mxu0
  %v1393 = vadd.f32 %v1344, %v1392
  %v1394 = vpop.f32.mrf.mxu0
  %v1395 = vadd.f32 %v1346, %v1394
  %1396 = vmatmul.bf16.gmra.mxu0 %v337
  %v1397 = vpop.f32.mrf.mxu0
  %v1398 = vadd.f32 %v1349, %v1397
  %v1399 = vpop.f32.mrf.mxu0
  %v1400 = vadd.f32 %v1351, %v1399
  %1401 = vdwg.mxu0
  %1402 = vmatpush.bf16.msra.mxu0 %v784
  %1403 = vmatpush.bf16.msra.mxu0 %v780
  %1404 = vmatpush.bf16.msra.mxu0 %v776
  %1405 = vmatpush.bf16.msra.mxu0 %v772
  %1406 = vmatpush.bf16.msra.mxu0 %v768
  %1407 = vmatpush.bf16.msra.mxu0 %v764
  %1408 = vmatpush.bf16.msra.mxu0 %v760
  %1409 = vmatpush.bf16.msra.mxu0 %v756
  %1410 = vmatmul.bf16.gmra.mxu0 %v306
  %v1411 = vpop.f32.mrf.mxu0
  %v1412 = vadd.f32 %v204, %v1411
  %v1413 = vpop.f32.mrf.mxu0
  %v1414 = vadd.f32 %v204, %v1413
  %1415 = vmatmul.bf16.gmra.mxu0 %v310
  %v1416 = vpop.f32.mrf.mxu0
  %v1417 = vadd.f32 %v204, %v1416
  %v1418 = vpop.f32.mrf.mxu0
  %v1419 = vadd.f32 %v204, %v1418
  %1420 = vmatmul.bf16.gmra.mxu0 %v314
  %v1421 = vpop.f32.mrf.mxu0
  %v1422 = vadd.f32 %v204, %v1421
  %v1423 = vpop.f32.mrf.mxu0
  %v1424 = vadd.f32 %v204, %v1423
  %1425 = vmatmul.bf16.gmra.mxu0 %v318
  %v1426 = vpop.f32.mrf.mxu0
  %v1427 = vadd.f32 %v204, %v1426
  %v1428 = vpop.f32.mrf.mxu0
  %v1429 = vadd.f32 %v204, %v1428
  %1430 = vmatmul.bf16.gmra.mxu0 %v322
  %v1431 = vpop.f32.mrf.mxu0
  %v1432 = vadd.f32 %v204, %v1431
  %v1433 = vpop.f32.mrf.mxu0
  %v1434 = vadd.f32 %v204, %v1433
  %1435 = vmatmul.bf16.gmra.mxu0 %v326
  %v1436 = vpop.f32.mrf.mxu0
  %v1437 = vadd.f32 %v204, %v1436
  %v1438 = vpop.f32.mrf.mxu0
  %v1439 = vadd.f32 %v204, %v1438
  %1440 = vmatmul.bf16.gmra.mxu0 %v330
  %v1441 = vpop.f32.mrf.mxu0
  %v1442 = vadd.f32 %v204, %v1441
  %v1443 = vpop.f32.mrf.mxu0
  %v1444 = vadd.f32 %v204, %v1443
  %1445 = vmatmul.bf16.gmra.mxu0 %v334
  %v1446 = vpop.f32.mrf.mxu0
  %v1447 = vadd.f32 %v204, %v1446
  %v1448 = vpop.f32.mrf.mxu0
  %v1449 = vadd.f32 %v204, %v1448
  %1450 = vdwg.mxu0
  %1451 = vmatpush.bf16.msra.mxu0 %v816
  %1452 = vmatpush.bf16.msra.mxu0 %v812
  %1453 = vmatpush.bf16.msra.mxu0 %v808
  %1454 = vmatpush.bf16.msra.mxu0 %v804
  %1455 = vmatpush.bf16.msra.mxu0 %v800
  %1456 = vmatpush.bf16.msra.mxu0 %v796
  %1457 = vmatpush.bf16.msra.mxu0 %v792
  %1458 = vmatpush.bf16.msra.mxu0 %v788
  %1459 = vmatmul.bf16.gmra.mxu0 %v307
  %v1460 = vpop.f32.mrf.mxu0
  %v1461 = vadd.f32 %v1412, %v1460
  %v1462 = vpop.f32.mrf.mxu0
  %v1463 = vadd.f32 %v1414, %v1462
  %1464 = vmatmul.bf16.gmra.mxu0 %v311
  %v1465 = vpop.f32.mrf.mxu0
  %v1466 = vadd.f32 %v1417, %v1465
  %v1467 = vpop.f32.mrf.mxu0
  %v1468 = vadd.f32 %v1419, %v1467
  %1469 = vmatmul.bf16.gmra.mxu0 %v315
  %v1470 = vpop.f32.mrf.mxu0
  %v1471 = vadd.f32 %v1422, %v1470
  %v1472 = vpop.f32.mrf.mxu0
  %v1473 = vadd.f32 %v1424, %v1472
  %1474 = vmatmul.bf16.gmra.mxu0 %v319
  %v1475 = vpop.f32.mrf.mxu0
  %v1476 = vadd.f32 %v1427, %v1475
  %v1477 = vpop.f32.mrf.mxu0
  %v1478 = vadd.f32 %v1429, %v1477
  %1479 = vmatmul.bf16.gmra.mxu0 %v323
  %v1480 = vpop.f32.mrf.mxu0
  %v1481 = vadd.f32 %v1432, %v1480
  %v1482 = vpop.f32.mrf.mxu0
  %v1483 = vadd.f32 %v1434, %v1482
  %1484 = vmatmul.bf16.gmra.mxu0 %v327
  %v1485 = vpop.f32.mrf.mxu0
  %v1486 = vadd.f32 %v1437, %v1485
  %v1487 = vpop.f32.mrf.mxu0
  %v1488 = vadd.f32 %v1439, %v1487
  %1489 = vmatmul.bf16.gmra.mxu0 %v331
  %v1490 = vpop.f32.mrf.mxu0
  %v1491 = vadd.f32 %v1442, %v1490
  %v1492 = vpop.f32.mrf.mxu0
  %v1493 = vadd.f32 %v1444, %v1492
  %1494 = vmatmul.bf16.gmra.mxu0 %v335
  %v1495 = vpop.f32.mrf.mxu0
  %v1496 = vadd.f32 %v1447, %v1495
  %v1497 = vpop.f32.mrf.mxu0
  %v1498 = vadd.f32 %v1449, %v1497
  %1499 = vdwg.mxu0
  %1500 = vmatpush.bf16.msra.mxu0 %v848
  %1501 = vmatpush.bf16.msra.mxu0 %v844
  %1502 = vmatpush.bf16.msra.mxu0 %v840
  %1503 = vmatpush.bf16.msra.mxu0 %v836
  %1504 = vmatpush.bf16.msra.mxu0 %v832
  %1505 = vmatpush.bf16.msra.mxu0 %v828
  %1506 = vmatpush.bf16.msra.mxu0 %v824
  %1507 = vmatpush.bf16.msra.mxu0 %v820
  %1508 = vmatmul.bf16.gmra.mxu0 %v308
  %v1509 = vpop.f32.mrf.mxu0
  %v1510 = vadd.f32 %v1461, %v1509
  %v1511 = vpop.f32.mrf.mxu0
  %v1512 = vadd.f32 %v1463, %v1511
  %1513 = vmatmul.bf16.gmra.mxu0 %v312
  %v1514 = vpop.f32.mrf.mxu0
  %v1515 = vadd.f32 %v1466, %v1514
  %v1516 = vpop.f32.mrf.mxu0
  %v1517 = vadd.f32 %v1468, %v1516
  %1518 = vmatmul.bf16.gmra.mxu0 %v316
  %v1519 = vpop.f32.mrf.mxu0
  %v1520 = vadd.f32 %v1471, %v1519
  %v1521 = vpop.f32.mrf.mxu0
  %v1522 = vadd.f32 %v1473, %v1521
  %1523 = vmatmul.bf16.gmra.mxu0 %v320
  %v1524 = vpop.f32.mrf.mxu0
  %v1525 = vadd.f32 %v1476, %v1524
  %v1526 = vpop.f32.mrf.mxu0
  %v1527 = vadd.f32 %v1478, %v1526
  %1528 = vmatmul.bf16.gmra.mxu0 %v324
  %v1529 = vpop.f32.mrf.mxu0
  %v1530 = vadd.f32 %v1481, %v1529
  %v1531 = vpop.f32.mrf.mxu0
  %v1532 = vadd.f32 %v1483, %v1531
  %1533 = vmatmul.bf16.gmra.mxu0 %v328
  %v1534 = vpop.f32.mrf.mxu0
  %v1535 = vadd.f32 %v1486, %v1534
  %v1536 = vpop.f32.mrf.mxu0
  %v1537 = vadd.f32 %v1488, %v1536
  %1538 = vmatmul.bf16.gmra.mxu0 %v332
  %v1539 = vpop.f32.mrf.mxu0
  %v1540 = vadd.f32 %v1491, %v1539
  %v1541 = vpop.f32.mrf.mxu0
  %v1542 = vadd.f32 %v1493, %v1541
  %1543 = vmatmul.bf16.gmra.mxu0 %v336
  %v1544 = vpop.f32.mrf.mxu0
  %v1545 = vadd.f32 %v1496, %v1544
  %v1546 = vpop.f32.mrf.mxu0
  %v1547 = vadd.f32 %v1498, %v1546
  %1548 = vdwg.mxu0
  %1549 = vmatpush.bf16.msra.mxu0 %v880
  %1550 = vmatpush.bf16.msra.mxu0 %v876
  %1551 = vmatpush.bf16.msra.mxu0 %v872
  %1552 = vmatpush.bf16.msra.mxu0 %v868
  %1553 = vmatpush.bf16.msra.mxu0 %v864
  %1554 = vmatpush.bf16.msra.mxu0 %v860
  %1555 = vmatpush.bf16.msra.mxu0 %v856
  %1556 = vmatpush.bf16.msra.mxu0 %v852
  %1557 = vmatmul.bf16.gmra.mxu0 %v309
  %v1558 = vpop.f32.mrf.mxu0
  %v1559 = vadd.f32 %v1510, %v1558
  %v1560 = vpop.f32.mrf.mxu0
  %v1561 = vadd.f32 %v1512, %v1560
  %1562 = vmatmul.bf16.gmra.mxu0 %v313
  %v1563 = vpop.f32.mrf.mxu0
  %v1564 = vadd.f32 %v1515, %v1563
  %v1565 = vpop.f32.mrf.mxu0
  %v1566 = vadd.f32 %v1517, %v1565
  %1567 = vmatmul.bf16.gmra.mxu0 %v317
  %v1568 = vpop.f32.mrf.mxu0
  %v1569 = vadd.f32 %v1520, %v1568
  %v1570 = vpop.f32.mrf.mxu0
  %v1571 = vadd.f32 %v1522, %v1570
  %1572 = vmatmul.bf16.gmra.mxu0 %v321
  %v1573 = vpop.f32.mrf.mxu0
  %v1574 = vadd.f32 %v1525, %v1573
  %v1575 = vpop.f32.mrf.mxu0
  %v1576 = vadd.f32 %v1527, %v1575
  %1577 = vmatmul.bf16.gmra.mxu0 %v325
  %v1578 = vpop.f32.mrf.mxu0
  %v1579 = vadd.f32 %v1530, %v1578
  %v1580 = vpop.f32.mrf.mxu0
  %v1581 = vadd.f32 %v1532, %v1580
  %1582 = vmatmul.bf16.gmra.mxu0 %v329
  %v1583 = vpop.f32.mrf.mxu0
  %v1584 = vadd.f32 %v1535, %v1583
  %v1585 = vpop.f32.mrf.mxu0
  %v1586 = vadd.f32 %v1537, %v1585
  %1587 = vmatmul.bf16.gmra.mxu0 %v333
  %v1588 = vpop.f32.mrf.mxu0
  %v1589 = vadd.f32 %v1540, %v1588
  %v1590 = vpop.f32.mrf.mxu0
  %v1591 = vadd.f32 %v1542, %v1590
  %1592 = vmatmul.bf16.gmra.mxu0 %v337
  %v1593 = vpop.f32.mrf.mxu0
  %v1594 = vadd.f32 %v1545, %v1593
  %v1595 = vpop.f32.mrf.mxu0
  %v1596 = vadd.f32 %v1547, %v1595
  %1597 = vdwg.mxu0
  %1598 = vmatpush.bf16.msra.mxu0 %v785
  %1599 = vmatpush.bf16.msra.mxu0 %v781
  %1600 = vmatpush.bf16.msra.mxu0 %v777
  %1601 = vmatpush.bf16.msra.mxu0 %v773
  %1602 = vmatpush.bf16.msra.mxu0 %v769
  %1603 = vmatpush.bf16.msra.mxu0 %v765
  %1604 = vmatpush.bf16.msra.mxu0 %v761
  %1605 = vmatpush.bf16.msra.mxu0 %v757
  %1606 = vmatmul.bf16.gmra.mxu0 %v306
  %v1607 = vpop.f32.mrf.mxu0
  %v1608 = vadd.f32 %v205, %v1607
  %v1609 = vpop.f32.mrf.mxu0
  %v1610 = vadd.f32 %v205, %v1609
  %1611 = vmatmul.bf16.gmra.mxu0 %v310
  %v1612 = vpop.f32.mrf.mxu0
  %v1613 = vadd.f32 %v205, %v1612
  %v1614 = vpop.f32.mrf.mxu0
  %v1615 = vadd.f32 %v205, %v1614
  %1616 = vmatmul.bf16.gmra.mxu0 %v314
  %v1617 = vpop.f32.mrf.mxu0
  %v1618 = vadd.f32 %v205, %v1617
  %v1619 = vpop.f32.mrf.mxu0
  %v1620 = vadd.f32 %v205, %v1619
  %1621 = vmatmul.bf16.gmra.mxu0 %v318
  %v1622 = vpop.f32.mrf.mxu0
  %v1623 = vadd.f32 %v205, %v1622
  %v1624 = vpop.f32.mrf.mxu0
  %v1625 = vadd.f32 %v205, %v1624
  %1626 = vmatmul.bf16.gmra.mxu0 %v322
  %v1627 = vpop.f32.mrf.mxu0
  %v1628 = vadd.f32 %v205, %v1627
  %v1629 = vpop.f32.mrf.mxu0
  %v1630 = vadd.f32 %v205, %v1629
  %1631 = vmatmul.bf16.gmra.mxu0 %v326
  %v1632 = vpop.f32.mrf.mxu0
  %v1633 = vadd.f32 %v205, %v1632
  %v1634 = vpop.f32.mrf.mxu0
  %v1635 = vadd.f32 %v205, %v1634
  %1636 = vmatmul.bf16.gmra.mxu0 %v330
  %v1637 = vpop.f32.mrf.mxu0
  %v1638 = vadd.f32 %v205, %v1637
  %v1639 = vpop.f32.mrf.mxu0
  %v1640 = vadd.f32 %v205, %v1639
  %1641 = vmatmul.bf16.gmra.mxu0 %v334
  %v1642 = vpop.f32.mrf.mxu0
  %v1643 = vadd.f32 %v205, %v1642
  %v1644 = vpop.f32.mrf.mxu0
  %v1645 = vadd.f32 %v205, %v1644
  %1646 = vdwg.mxu0
  %1647 = vmatpush.bf16.msra.mxu0 %v817
  %1648 = vmatpush.bf16.msra.mxu0 %v813
  %1649 = vmatpush.bf16.msra.mxu0 %v809
  %1650 = vmatpush.bf16.msra.mxu0 %v805
  %1651 = vmatpush.bf16.msra.mxu0 %v801
  %1652 = vmatpush.bf16.msra.mxu0 %v797
  %1653 = vmatpush.bf16.msra.mxu0 %v793
  %1654 = vmatpush.bf16.msra.mxu0 %v789
  %1655 = vmatmul.bf16.gmra.mxu0 %v307
  %v1656 = vpop.f32.mrf.mxu0
  %v1657 = vadd.f32 %v1608, %v1656
  %v1658 = vpop.f32.mrf.mxu0
  %v1659 = vadd.f32 %v1610, %v1658
  %1660 = vmatmul.bf16.gmra.mxu0 %v311
  %v1661 = vpop.f32.mrf.mxu0
  %v1662 = vadd.f32 %v1613, %v1661
  %v1663 = vpop.f32.mrf.mxu0
  %v1664 = vadd.f32 %v1615, %v1663
  %1665 = vmatmul.bf16.gmra.mxu0 %v315
  %v1666 = vpop.f32.mrf.mxu0
  %v1667 = vadd.f32 %v1618, %v1666
  %v1668 = vpop.f32.mrf.mxu0
  %v1669 = vadd.f32 %v1620, %v1668
  %1670 = vmatmul.bf16.gmra.mxu0 %v319
  %v1671 = vpop.f32.mrf.mxu0
  %v1672 = vadd.f32 %v1623, %v1671
  %v1673 = vpop.f32.mrf.mxu0
  %v1674 = vadd.f32 %v1625, %v1673
  %1675 = vmatmul.bf16.gmra.mxu0 %v323
  %v1676 = vpop.f32.mrf.mxu0
  %v1677 = vadd.f32 %v1628, %v1676
  %v1678 = vpop.f32.mrf.mxu0
  %v1679 = vadd.f32 %v1630, %v1678
  %1680 = vmatmul.bf16.gmra.mxu0 %v327
  %v1681 = vpop.f32.mrf.mxu0
  %v1682 = vadd.f32 %v1633, %v1681
  %v1683 = vpop.f32.mrf.mxu0
  %v1684 = vadd.f32 %v1635, %v1683
  %1685 = vmatmul.bf16.gmra.mxu0 %v331
  %v1686 = vpop.f32.mrf.mxu0
  %v1687 = vadd.f32 %v1638, %v1686
  %v1688 = vpop.f32.mrf.mxu0
  %v1689 = vadd.f32 %v1640, %v1688
  %1690 = vmatmul.bf16.gmra.mxu0 %v335
  %v1691 = vpop.f32.mrf.mxu0
  %v1692 = vadd.f32 %v1643, %v1691
  %v1693 = vpop.f32.mrf.mxu0
  %v1694 = vadd.f32 %v1645, %v1693
  %1695 = vdwg.mxu0
  %1696 = vmatpush.bf16.msra.mxu0 %v849
  %1697 = vmatpush.bf16.msra.mxu0 %v845
  %1698 = vmatpush.bf16.msra.mxu0 %v841
  %1699 = vmatpush.bf16.msra.mxu0 %v837
  %1700 = vmatpush.bf16.msra.mxu0 %v833
  %1701 = vmatpush.bf16.msra.mxu0 %v829
  %1702 = vmatpush.bf16.msra.mxu0 %v825
  %1703 = vmatpush.bf16.msra.mxu0 %v821
  %1704 = vmatmul.bf16.gmra.mxu0 %v308
  %v1705 = vpop.f32.mrf.mxu0
  %v1706 = vadd.f32 %v1657, %v1705
  %v1707 = vpop.f32.mrf.mxu0
  %v1708 = vadd.f32 %v1659, %v1707
  %1709 = vmatmul.bf16.gmra.mxu0 %v312
  %v1710 = vpop.f32.mrf.mxu0
  %v1711 = vadd.f32 %v1662, %v1710
  %v1712 = vpop.f32.mrf.mxu0
  %v1713 = vadd.f32 %v1664, %v1712
  %1714 = vmatmul.bf16.gmra.mxu0 %v316
  %v1715 = vpop.f32.mrf.mxu0
  %v1716 = vadd.f32 %v1667, %v1715
  %v1717 = vpop.f32.mrf.mxu0
  %v1718 = vadd.f32 %v1669, %v1717
  %1719 = vmatmul.bf16.gmra.mxu0 %v320
  %v1720 = vpop.f32.mrf.mxu0
  %v1721 = vadd.f32 %v1672, %v1720
  %v1722 = vpop.f32.mrf.mxu0
  %v1723 = vadd.f32 %v1674, %v1722
  %1724 = vmatmul.bf16.gmra.mxu0 %v324
  %v1725 = vpop.f32.mrf.mxu0
  %v1726 = vadd.f32 %v1677, %v1725
  %v1727 = vpop.f32.mrf.mxu0
  %v1728 = vadd.f32 %v1679, %v1727
  %1729 = vmatmul.bf16.gmra.mxu0 %v328
  %v1730 = vpop.f32.mrf.mxu0
  %v1731 = vadd.f32 %v1682, %v1730
  %v1732 = vpop.f32.mrf.mxu0
  %v1733 = vadd.f32 %v1684, %v1732
  %1734 = vmatmul.bf16.gmra.mxu0 %v332
  %v1735 = vpop.f32.mrf.mxu0
  %v1736 = vadd.f32 %v1687, %v1735
  %v1737 = vpop.f32.mrf.mxu0
  %v1738 = vadd.f32 %v1689, %v1737
  %1739 = vmatmul.bf16.gmra.mxu0 %v336
  %v1740 = vpop.f32.mrf.mxu0
  %v1741 = vadd.f32 %v1692, %v1740
  %v1742 = vpop.f32.mrf.mxu0
  %v1743 = vadd.f32 %v1694, %v1742
  %1744 = vdwg.mxu0
  %1745 = vmatpush.bf16.msra.mxu0 %v881
  %1746 = vmatpush.bf16.msra.mxu0 %v877
  %1747 = vmatpush.bf16.msra.mxu0 %v873
  %1748 = vmatpush.bf16.msra.mxu0 %v869
  %1749 = vmatpush.bf16.msra.mxu0 %v865
  %1750 = vmatpush.bf16.msra.mxu0 %v861
  %1751 = vmatpush.bf16.msra.mxu0 %v857
  %1752 = vmatpush.bf16.msra.mxu0 %v853
  %1753 = vmatmul.bf16.gmra.mxu0 %v309
  %v1754 = vpop.f32.mrf.mxu0
  %v1755 = vadd.f32 %v1706, %v1754
  %v1756 = vpop.f32.mrf.mxu0
  %v1757 = vadd.f32 %v1708, %v1756
  %1758 = vmatmul.bf16.gmra.mxu0 %v313
  %v1759 = vpop.f32.mrf.mxu0
  %v1760 = vadd.f32 %v1711, %v1759
  %v1761 = vpop.f32.mrf.mxu0
  %v1762 = vadd.f32 %v1713, %v1761
  %1763 = vmatmul.bf16.gmra.mxu0 %v317
  %v1764 = vpop.f32.mrf.mxu0
  %v1765 = vadd.f32 %v1716, %v1764
  %v1766 = vpop.f32.mrf.mxu0
  %v1767 = vadd.f32 %v1718, %v1766
  %1768 = vmatmul.bf16.gmra.mxu0 %v321
  %v1769 = vpop.f32.mrf.mxu0
  %v1770 = vadd.f32 %v1721, %v1769
  %v1771 = vpop.f32.mrf.mxu0
  %v1772 = vadd.f32 %v1723, %v1771
  %1773 = vmatmul.bf16.gmra.mxu0 %v325
  %v1774 = vpop.f32.mrf.mxu0
  %v1775 = vadd.f32 %v1726, %v1774
  %v1776 = vpop.f32.mrf.mxu0
  %v1777 = vadd.f32 %v1728, %v1776
  %1778 = vmatmul.bf16.gmra.mxu0 %v329
  %v1779 = vpop.f32.mrf.mxu0
  %v1780 = vadd.f32 %v1731, %v1779
  %v1781 = vpop.f32.mrf.mxu0
  %v1782 = vadd.f32 %v1733, %v1781
  %1783 = vmatmul.bf16.gmra.mxu0 %v333
  %v1784 = vpop.f32.mrf.mxu0
  %v1785 = vadd.f32 %v1736, %v1784
  %v1786 = vpop.f32.mrf.mxu0
  %v1787 = vadd.f32 %v1738, %v1786
  %1788 = vmatmul.bf16.gmra.mxu0 %v337
  %v1789 = vpop.f32.mrf.mxu0
  %v1790 = vadd.f32 %v1741, %v1789
  %v1791 = vpop.f32.mrf.mxu0
  %v1792 = vadd.f32 %v1743, %v1791
  %1793 = vdwg.mxu0
  %v1794 = vmax.f32 %v1167, 0.0
  %v1795 = vmax.f32 %v1363, 0.0
  %v1796 = vmax.f32 %v1559, 0.0
  %v1797 = vmax.f32 %v1755, 0.0
  %v1798 = vmax.f32 %v1169, 0.0
  %v1799 = vmax.f32 %v1365, 0.0
  %v1800 = vmax.f32 %v1561, 0.0
  %v1801 = vmax.f32 %v1757, 0.0
  %v1802 = vmax.f32 %v1172, 0.0
  %v1803 = vmax.f32 %v1368, 0.0
  %v1804 = vmax.f32 %v1564, 0.0
  %v1805 = vmax.f32 %v1760, 0.0
  %v1806 = vmax.f32 %v1174, 0.0
  %v1807 = vmax.f32 %v1370, 0.0
  %v1808 = vmax.f32 %v1566, 0.0
  %v1809 = vmax.f32 %v1762, 0.0
  %v1810 = vmax.f32 %v1177, 0.0
  %v1811 = vmax.f32 %v1373, 0.0
  %v1812 = vmax.f32 %v1569, 0.0
  %v1813 = vmax.f32 %v1765, 0.0
  %v1814 = vmax.f32 %v1179, 0.0
  %v1815 = vmax.f32 %v1375, 0.0
  %v1816 = vmax.f32 %v1571, 0.0
  %v1817 = vmax.f32 %v1767, 0.0
  %v1818 = vmax.f32 %v1182, 0.0
  %v1819 = vmax.f32 %v1378, 0.0
  %v1820 = vmax.f32 %v1574, 0.0
  %v1821 = vmax.f32 %v1770, 0.0
  %v1822 = vmax.f32 %v1184, 0.0
  %v1823 = vmax.f32 %v1380, 0.0
  %v1824 = vmax.f32 %v1576, 0.0
  %v1825 = vmax.f32 %v1772, 0.0
  %v1826 = vmax.f32 %v1187, 0.0
  %v1827 = vmax.f32 %v1383, 0.0
  %v1828 = vmax.f32 %v1579, 0.0
  %v1829 = vmax.f32 %v1775, 0.0
  %v1830 = vmax.f32 %v1189, 0.0
  %v1831 = vmax.f32 %v1385, 0.0
  %v1832 = vmax.f32 %v1581, 0.0
  %v1833 = vmax.f32 %v1777, 0.0
  %v1834 = vmax.f32 %v1192, 0.0
  %v1835 = vmax.f32 %v1388, 0.0
  %v1836 = vmax.f32 %v1584, 0.0
  %v1837 = vmax.f32 %v1780, 0.0
  %v1838 = vmax.f32 %v1194, 0.0
  %v1839 = vmax.f32 %v1390, 0.0
  %v1840 = vmax.f32 %v1586, 0.0
  %v1841 = vmax.f32 %v1782, 0.0
  %v1842 = vmax.f32 %v1197, 0.0
  %v1843 = vmax.f32 %v1393, 0.0
  %v1844 = vmax.f32 %v1589, 0.0
  %v1845 = vmax.f32 %v1785, 0.0
  %v1846 = vmax.f32 %v1199, 0.0
  %v1847 = vmax.f32 %v1395, 0.0
  %v1848 = vmax.f32 %v1591, 0.0
  %v1849 = vmax.f32 %v1787, 0.0
  %v1850 = vmax.f32 %v1202, 0.0
  %v1851 = vmax.f32 %v1398, 0.0
  %v1852 = vmax.f32 %v1594, 0.0
  %v1853 = vmax.f32 %v1790, 0.0
  %v1854 = vmax.f32 %v1204, 0.0
  %v1855 = vmax.f32 %v1400, 0.0
  %v1856 = vmax.f32 %v1596, 0.0
  %v1857 = vmax.f32 %v1792, 0.0
  %v1858 = vld [vmem:[#allocation2] sm:$0xff]
  %v1859 = vld [vmem:[#allocation2 + $0x8] sm:$0xff]
  %v1860 = vld [vmem:[#allocation2 + $0x10] sm:$0xff]
  %v1861 = vld [vmem:[#allocation2 + $0x18] sm:$0xff]
  %v1862 = vld [vmem:[#allocation2 + $0x20] sm:$0xff]
  %v1863 = vld [vmem:[#allocation2 + $0x28] sm:$0xff]
  %v1864 = vld [vmem:[#allocation2 + $0x30] sm:$0xff]
  %v1865 = vld [vmem:[#allocation2 + $0x38] sm:$0xff]
  %v1866 = vld [vmem:[#allocation2 + $0x40] sm:$0xff]
  %v1867 = vld [vmem:[#allocation2 + $0x48] sm:$0xff]
  %v1868 = vld [vmem:[#allocation2 + $0x50] sm:$0xff]
  %v1869 = vld [vmem:[#allocation2 + $0x58] sm:$0xff]
  %v1870 = vld [vmem:[#allocation2 + $0x60] sm:$0xff]
  %v1871 = vld [vmem:[#allocation2 + $0x68] sm:$0xff]
  %v1872 = vld [vmem:[#allocation2 + $0x70] sm:$0xff]
  %v1873 = vld [vmem:[#allocation2 + $0x78] sm:$0xff]
  %v1874 = vpack.c.bf16 %v1798, %v1794
  %v1875 = vpack.c.bf16 %v1799, %v1795
  %v1876 = vpack.c.bf16 %v1800, %v1796
  %v1877 = vpack.c.bf16 %v1801, %v1797
  %v1878 = vpack.c.bf16 %v1806, %v1802
  %v1879 = vpack.c.bf16 %v1807, %v1803
  %v1880 = vpack.c.bf16 %v1808, %v1804
  %v1881 = vpack.c.bf16 %v1809, %v1805
  %v1882 = vpack.c.bf16 %v1814, %v1810
  %v1883 = vpack.c.bf16 %v1815, %v1811
  %v1884 = vpack.c.bf16 %v1816, %v1812
  %v1885 = vpack.c.bf16 %v1817, %v1813
  %v1886 = vpack.c.bf16 %v1822, %v1818
  %v1887 = vpack.c.bf16 %v1823, %v1819
  %v1888 = vpack.c.bf16 %v1824, %v1820
  %v1889 = vpack.c.bf16 %v1825, %v1821
  %v1890 = vpack.c.bf16 %v1830, %v1826
  %v1891 = vpack.c.bf16 %v1831, %v1827
  %v1892 = vpack.c.bf16 %v1832, %v1828
  %v1893 = vpack.c.bf16 %v1833, %v1829
  %v1894 = vpack.c.bf16 %v1838, %v1834
  %v1895 = vpack.c.bf16 %v1839, %v1835
  %v1896 = vpack.c.bf16 %v1840, %v1836
  %v1897 = vpack.c.bf16 %v1841, %v1837
  %v1898 = vpack.c.bf16 %v1846, %v1842
  %v1899 = vpack.c.bf16 %v1847, %v1843
  %v1900 = vpack.c.bf16 %v1848, %v1844
  %v1901 = vpack.c.bf16 %v1849, %v1845
  %v1902 = vpack.c.bf16 %v1854, %v1850
  %v1903 = vpack.c.bf16 %v1855, %v1851
  %v1904 = vpack.c.bf16 %v1856, %v1852
  %v1905 = vpack.c.bf16 %v1857, %v1853
  %v1906 = vld [vmem:[%s3] sm:$0xf]
  %v1907 = vld [vmem:[%s3 + $0x4] sm:$0xf]
  %v1908 = vld [vmem:[%s3 + $0x8] sm:$0xf]
  %v1909 = vld [vmem:[%s3 + $0xc] sm:$0xf]
  %v1910 = vld [vmem:[%s3 + $0x10] sm:$0xf]
  %v1911 = vld [vmem:[%s3 + $0x14] sm:$0xf]
  %v1912 = vld [vmem:[%s3 + $0x18] sm:$0xf]
  %v1913 = vld [vmem:[%s3 + $0x1c] sm:$0xf]
  %v1914 = vld [vmem:[%s3 + $0x20] sm:$0xf]
  %v1915 = vld [vmem:[%s3 + $0x24] sm:$0xf]
  %v1916 = vld [vmem:[%s3 + $0x28] sm:$0xf]
  %v1917 = vld [vmem:[%s3 + $0x2c] sm:$0xf]
  %v1918 = vld [vmem:[%s3 + $0x30] sm:$0xf]
  %v1919 = vld [vmem:[%s3 + $0x34] sm:$0xf]
  %v1920 = vld [vmem:[%s3 + $0x38] sm:$0xf]
  %v1921 = vld [vmem:[%s3 + $0x3c] sm:$0xf]
  %v1922 = vld [vmem:[%s3 + $0x40] sm:$0xf]
  %v1923 = vld [vmem:[%s3 + $0x44] sm:$0xf]
  %v1924 = vld [vmem:[%s3 + $0x48] sm:$0xf]
  %v1925 = vld [vmem:[%s3 + $0x4c] sm:$0xf]
  %v1926 = vld [vmem:[%s3 + $0x50] sm:$0xf]
  %v1927 = vld [vmem:[%s3 + $0x54] sm:$0xf]
  %v1928 = vld [vmem:[%s3 + $0x58] sm:$0xf]
  %v1929 = vld [vmem:[%s3 + $0x5c] sm:$0xf]
  %v1930 = vld [vmem:[%s3 + $0x60] sm:$0xf]
  %v1931 = vld [vmem:[%s3 + $0x64] sm:$0xf]
  %v1932 = vld [vmem:[%s3 + $0x68] sm:$0xf]
  %v1933 = vld [vmem:[%s3 + $0x6c] sm:$0xf]
  %v1934 = vld [vmem:[%s3 + $0x70] sm:$0xf]
  %v1935 = vld [vmem:[%s3 + $0x74] sm:$0xf]
  %v1936 = vld [vmem:[%s3 + $0x78] sm:$0xf]
  %v1937 = vld [vmem:[%s3 + $0x7c] sm:$0xf]
  %v1938 = vld [vmem:[%s3 + $0x80] sm:$0xf]
  %v1939 = vld [vmem:[%s3 + $0x84] sm:$0xf]
  %v1940 = vld [vmem:[%s3 + $0x88] sm:$0xf]
  %v1941 = vld [vmem:[%s3 + $0x8c] sm:$0xf]
  %v1942 = vld [vmem:[%s3 + $0x90] sm:$0xf]
  %v1943 = vld [vmem:[%s3 + $0x94] sm:$0xf]
  %v1944 = vld [vmem:[%s3 + $0x98] sm:$0xf]
  %v1945 = vld [vmem:[%s3 + $0x9c] sm:$0xf]
  %v1946 = vld [vmem:[%s3 + $0xa0] sm:$0xf]
  %v1947 = vld [vmem:[%s3 + $0xa4] sm:$0xf]
  %v1948 = vld [vmem:[%s3 + $0xa8] sm:$0xf]
  %v1949 = vld [vmem:[%s3 + $0xac] sm:$0xf]
  %v1950 = vld [vmem:[%s3 + $0xb0] sm:$0xf]
  %v1951 = vld [vmem:[%s3 + $0xb4] sm:$0xf]
  %v1952 = vld [vmem:[%s3 + $0xb8] sm:$0xf]
  %v1953 = vld [vmem:[%s3 + $0xbc] sm:$0xf]
  %v1954 = vld [vmem:[%s3 + $0xc0] sm:$0xf]
  %v1955 = vld [vmem:[%s3 + $0xc4] sm:$0xf]
  %v1956 = vld [vmem:[%s3 + $0xc8] sm:$0xf]
  %v1957 = vld [vmem:[%s3 + $0xcc] sm:$0xf]
  %v1958 = vld [vmem:[%s3 + $0xd0] sm:$0xf]
  %v1959 = vld [vmem:[%s3 + $0xd4] sm:$0xf]
  %v1960 = vld [vmem:[%s3 + $0xd8] sm:$0xf]
  %v1961 = vld [vmem:[%s3 + $0xdc] sm:$0xf]
  %v1962 = vld [vmem:[%s3 + $0xe0] sm:$0xf]
  %v1963 = vld [vmem:[%s3 + $0xe4] sm:$0xf]
  %v1964 = vld [vmem:[%s3 + $0xe8] sm:$0xf]
  %v1965 = vld [vmem:[%s3 + $0xec] sm:$0xf]
  %v1966 = vld [vmem:[%s3 + $0xf0] sm:$0xf]
  %v1967 = vld [vmem:[%s3 + $0xf4] sm:$0xf]
  %v1968 = vld [vmem:[%s3 + $0xf8] sm:$0xf]
  %v1969 = vld [vmem:[%s3 + $0xfc] sm:$0xf]
  %v2034 = vunpack.c.l.b16 %v1906
  %v2035 = vunpack.c.l.b16 %v1907
  %v2036 = vunpack.c.l.b16 %v1908
  %v2037 = vunpack.c.l.b16 %v1909
  %v2038 = vunpack.c.l.b16 %v1910
  %v2039 = vunpack.c.l.b16 %v1911
  %v2040 = vunpack.c.l.b16 %v1912
  %v2041 = vunpack.c.l.b16 %v1913
  %v2042 = vunpack.c.l.b16 %v1914
  %v2043 = vunpack.c.l.b16 %v1915
  %v2044 = vunpack.c.l.b16 %v1916
  %v2045 = vunpack.c.l.b16 %v1917
  %v2046 = vunpack.c.l.b16 %v1918
  %v2047 = vunpack.c.l.b16 %v1919
  %v2048 = vunpack.c.l.b16 %v1920
  %v2049 = vunpack.c.l.b16 %v1921
  %v2050 = vunpack.c.l.b16 %v1922
  %v2051 = vunpack.c.l.b16 %v1923
  %v2052 = vunpack.c.l.b16 %v1924
  %v2053 = vunpack.c.l.b16 %v1925
  %v2054 = vunpack.c.l.b16 %v1926
  %v2055 = vunpack.c.l.b16 %v1927
  %v2056 = vunpack.c.l.b16 %v1928
  %v2057 = vunpack.c.l.b16 %v1929
  %v2058 = vunpack.c.l.b16 %v1930
  %v2059 = vunpack.c.l.b16 %v1931
  %v2060 = vunpack.c.l.b16 %v1932
  %v2061 = vunpack.c.l.b16 %v1933
  %v2062 = vunpack.c.l.b16 %v1934
  %v2063 = vunpack.c.l.b16 %v1935
  %v2064 = vunpack.c.l.b16 %v1936
  %v2065 = vunpack.c.l.b16 %v1937
  %v2066 = vunpack.c.l.b16 %v1938
  %v2067 = vunpack.c.l.b16 %v1939
  %v2068 = vunpack.c.l.b16 %v1940
  %v2069 = vunpack.c.l.b16 %v1941
  %v2070 = vunpack.c.l.b16 %v1942
  %v2071 = vunpack.c.l.b16 %v1943
  %v2072 = vunpack.c.l.b16 %v1944
  %v2073 = vunpack.c.l.b16 %v1945
  %v2074 = vunpack.c.l.b16 %v1946
  %v2075 = vunpack.c.l.b16 %v1947
  %v2076 = vunpack.c.l.b16 %v1948
  %v2077 = vunpack.c.l.b16 %v1949
  %v2078 = vunpack.c.l.b16 %v1950
  %v2079 = vunpack.c.l.b16 %v1951
  %v2080 = vunpack.c.l.b16 %v1952
  %v2081 = vunpack.c.l.b16 %v1953
  %v2082 = vunpack.c.l.b16 %v1954
  %v2083 = vunpack.c.l.b16 %v1955
  %v2084 = vunpack.c.l.b16 %v1956
  %v2085 = vunpack.c.l.b16 %v1957
  %v2086 = vunpack.c.l.b16 %v1958
  %v2087 = vunpack.c.l.b16 %v1959
  %v2088 = vunpack.c.l.b16 %v1960
  %v2089 = vunpack.c.l.b16 %v1961
  %v2090 = vunpack.c.l.b16 %v1962
  %v2091 = vunpack.c.l.b16 %v1963
  %v2092 = vunpack.c.l.b16 %v1964
  %v2093 = vunpack.c.l.b16 %v1965
  %v2094 = vunpack.c.l.b16 %v1966
  %v2095 = vunpack.c.l.b16 %v1967
  %v2096 = vunpack.c.l.b16 %v1968
  %v2097 = vunpack.c.l.b16 %v1969
  %v2098 = vpack.c.b16 %v2035, %v2034
  %v2099 = vpack.c.b16 %v2037, %v2036
  %v2100 = vpack.c.b16 %v2039, %v2038
  %v2101 = vpack.c.b16 %v2041, %v2040
  %v2102 = vpack.c.b16 %v2043, %v2042
  %v2103 = vpack.c.b16 %v2045, %v2044
  %v2104 = vpack.c.b16 %v2047, %v2046
  %v2105 = vpack.c.b16 %v2049, %v2048
  %v2106 = vpack.c.b16 %v2051, %v2050
  %v2107 = vpack.c.b16 %v2053, %v2052
  %v2108 = vpack.c.b16 %v2055, %v2054
  %v2109 = vpack.c.b16 %v2057, %v2056
  %v2110 = vpack.c.b16 %v2059, %v2058
  %v2111 = vpack.c.b16 %v2061, %v2060
  %v2112 = vpack.c.b16 %v2063, %v2062
  %v2113 = vpack.c.b16 %v2065, %v2064
  %v2114 = vpack.c.b16 %v2067, %v2066
  %v2115 = vpack.c.b16 %v2069, %v2068
  %v2116 = vpack.c.b16 %v2071, %v2070
  %v2117 = vpack.c.b16 %v2073, %v2072
  %v2118 = vpack.c.b16 %v2075, %v2074
  %v2119 = vpack.c.b16 %v2077, %v2076
  %v2120 = vpack.c.b16 %v2079, %v2078
  %v2121 = vpack.c.b16 %v2081, %v2080
  %v2122 = vpack.c.b16 %v2083, %v2082
  %v2123 = vpack.c.b16 %v2085, %v2084
  %v2124 = vpack.c.b16 %v2087, %v2086
  %v2125 = vpack.c.b16 %v2089, %v2088
  %v2126 = vpack.c.b16 %v2091, %v2090
  %v2127 = vpack.c.b16 %v2093, %v2092
  %v2128 = vpack.c.b16 %v2095, %v2094
  %v2129 = vpack.c.b16 %v2097, %v2096
  %2162 = vmatpush.bf16.msra.mxu0 %v2105
  %2163 = vmatpush.bf16.msra.mxu0 %v2104
  %2164 = vmatpush.bf16.msra.mxu0 %v2103
  %2165 = vmatpush.bf16.msra.mxu0 %v2102
  %2166 = vmatpush.bf16.msra.mxu0 %v2101
  %2167 = vmatpush.bf16.msra.mxu0 %v2100
  %2168 = vmatpush.bf16.msra.mxu0 %v2099
  %2169 = vmatpush.bf16.msra.mxu0 %v2098
  %2170 = vmatmul.bf16.gmra.mxu0 %v1874
  %v2171 = vpop.f32.mrf.mxu0
  %v2172 = vadd.f32 0.0, %v2171
  %v2173 = vpop.f32.mrf.mxu0
  %v2174 = vadd.f32 0.0, %v2173
  %2175 = vmatmul.bf16.gmra.mxu0 %v1878
  %v2176 = vpop.f32.mrf.mxu0
  %v2177 = vadd.f32 0.0, %v2176
  %v2178 = vpop.f32.mrf.mxu0
  %v2179 = vadd.f32 0.0, %v2178
  %2180 = vmatmul.bf16.gmra.mxu0 %v1882
  %v2181 = vpop.f32.mrf.mxu0
  %v2182 = vadd.f32 0.0, %v2181
  %v2183 = vpop.f32.mrf.mxu0
  %v2184 = vadd.f32 0.0, %v2183
  %2185 = vmatmul.bf16.gmra.mxu0 %v1886
  %v2186 = vpop.f32.mrf.mxu0
  %v2187 = vadd.f32 0.0, %v2186
  %v2188 = vpop.f32.mrf.mxu0
  %v2189 = vadd.f32 0.0, %v2188
  %2190 = vmatmul.bf16.gmra.mxu0 %v1890
  %v2191 = vpop.f32.mrf.mxu0
  %v2192 = vadd.f32 0.0, %v2191
  %v2193 = vpop.f32.mrf.mxu0
  %v2194 = vadd.f32 0.0, %v2193
  %2195 = vmatmul.bf16.gmra.mxu0 %v1894
  %v2196 = vpop.f32.mrf.mxu0
  %v2197 = vadd.f32 0.0, %v2196
  %v2198 = vpop.f32.mrf.mxu0
  %v2199 = vadd.f32 0.0, %v2198
  %2200 = vmatmul.bf16.gmra.mxu0 %v1898
  %v2201 = vpop.f32.mrf.mxu0
  %v2202 = vadd.f32 0.0, %v2201
  %v2203 = vpop.f32.mrf.mxu0
  %v2204 = vadd.f32 0.0, %v2203
  %2205 = vmatmul.bf16.gmra.mxu0 %v1902
  %v2206 = vpop.f32.mrf.mxu0
  %v2207 = vadd.f32 0.0, %v2206
  %v2208 = vpop.f32.mrf.mxu0
  %v2209 = vadd.f32 0.0, %v2208
  %2210 = vdwg.mxu0
  %2211 = vmatpush.bf16.msra.mxu0 %v2113
  %2212 = vmatpush.bf16.msra.mxu0 %v2112
  %2213 = vmatpush.bf16.msra.mxu0 %v2111
  %2214 = vmatpush.bf16.msra.mxu0 %v2110
  %2215 = vmatpush.bf16.msra.mxu0 %v2109
  %2216 = vmatpush.bf16.msra.mxu0 %v2108
  %2217 = vmatpush.bf16.msra.mxu0 %v2107
  %2218 = vmatpush.bf16.msra.mxu0 %v2106
  %2219 = vmatmul.bf16.gmra.mxu0 %v1875
  %v2220 = vpop.f32.mrf.mxu0
  %v2221 = vadd.f32 %v2172, %v2220
  %v2222 = vpop.f32.mrf.mxu0
  %v2223 = vadd.f32 %v2174, %v2222
  %2224 = vmatmul.bf16.gmra.mxu0 %v1879
  %v2225 = vpop.f32.mrf.mxu0
  %v2226 = vadd.f32 %v2177, %v2225
  %v2227 = vpop.f32.mrf.mxu0
  %v2228 = vadd.f32 %v2179, %v2227
  %2229 = vmatmul.bf16.gmra.mxu0 %v1883
  %v2230 = vpop.f32.mrf.mxu0
  %v2231 = vadd.f32 %v2182, %v2230
  %v2232 = vpop.f32.mrf.mxu0
  %v2233 = vadd.f32 %v2184, %v2232
  %2234 = vmatmul.bf16.gmra.mxu0 %v1887
  %v2235 = vpop.f32.mrf.mxu0
  %v2236 = vadd.f32 %v2187, %v2235
  %v2237 = vpop.f32.mrf.mxu0
  %v2238 = vadd.f32 %v2189, %v2237
  %2239 = vmatmul.bf16.gmra.mxu0 %v1891
  %v2240 = vpop.f32.mrf.mxu0
  %v2241 = vadd.f32 %v2192, %v2240
  %v2242 = vpop.f32.mrf.mxu0
  %v2243 = vadd.f32 %v2194, %v2242
  %2244 = vmatmul.bf16.gmra.mxu0 %v1895
  %v2245 = vpop.f32.mrf.mxu0
  %v2246 = vadd.f32 %v2197, %v2245
  %v2247 = vpop.f32.mrf.mxu0
  %v2248 = vadd.f32 %v2199, %v2247
  %2249 = vmatmul.bf16.gmra.mxu0 %v1899
  %v2250 = vpop.f32.mrf.mxu0
  %v2251 = vadd.f32 %v2202, %v2250
  %v2252 = vpop.f32.mrf.mxu0
  %v2253 = vadd.f32 %v2204, %v2252
  %2254 = vmatmul.bf16.gmra.mxu0 %v1903
  %v2255 = vpop.f32.mrf.mxu0
  %v2256 = vadd.f32 %v2207, %v2255
  %v2257 = vpop.f32.mrf.mxu0
  %v2258 = vadd.f32 %v2209, %v2257
  %2259 = vdwg.mxu0
  %2260 = vmatpush.bf16.msra.mxu0 %v2121
  %2261 = vmatpush.bf16.msra.mxu0 %v2120
  %2262 = vmatpush.bf16.msra.mxu0 %v2119
  %2263 = vmatpush.bf16.msra.mxu0 %v2118
  %2264 = vmatpush.bf16.msra.mxu0 %v2117
  %2265 = vmatpush.bf16.msra.mxu0 %v2116
  %2266 = vmatpush.bf16.msra.mxu0 %v2115
  %2267 = vmatpush.bf16.msra.mxu0 %v2114
  %2268 = vmatmul.bf16.gmra.mxu0 %v1876
  %v2269 = vpop.f32.mrf.mxu0
  %v2270 = vadd.f32 %v2221, %v2269
  %v2271 = vpop.f32.mrf.mxu0
  %v2272 = vadd.f32 %v2223, %v2271
  %2273 = vmatmul.bf16.gmra.mxu0 %v1880
  %v2274 = vpop.f32.mrf.mxu0
  %v2275 = vadd.f32 %v2226, %v2274
  %v2276 = vpop.f32.mrf.mxu0
  %v2277 = vadd.f32 %v2228, %v2276
  %2278 = vmatmul.bf16.gmra.mxu0 %v1884
  %v2279 = vpop.f32.mrf.mxu0
  %v2280 = vadd.f32 %v2231, %v2279
  %v2281 = vpop.f32.mrf.mxu0
  %v2282 = vadd.f32 %v2233, %v2281
  %2283 = vmatmul.bf16.gmra.mxu0 %v1888
  %v2284 = vpop.f32.mrf.mxu0
  %v2285 = vadd.f32 %v2236, %v2284
  %v2286 = vpop.f32.mrf.mxu0
  %v2287 = vadd.f32 %v2238, %v2286
  %2288 = vmatmul.bf16.gmra.mxu0 %v1892
  %v2289 = vpop.f32.mrf.mxu0
  %v2290 = vadd.f32 %v2241, %v2289
  %v2291 = vpop.f32.mrf.mxu0
  %v2292 = vadd.f32 %v2243, %v2291
  %2293 = vmatmul.bf16.gmra.mxu0 %v1896
  %v2294 = vpop.f32.mrf.mxu0
  %v2295 = vadd.f32 %v2246, %v2294
  %v2296 = vpop.f32.mrf.mxu0
  %v2297 = vadd.f32 %v2248, %v2296
  %2298 = vmatmul.bf16.gmra.mxu0 %v1900
  %v2299 = vpop.f32.mrf.mxu0
  %v2300 = vadd.f32 %v2251, %v2299
  %v2301 = vpop.f32.mrf.mxu0
  %v2302 = vadd.f32 %v2253, %v2301
  %2303 = vmatmul.bf16.gmra.mxu0 %v1904
  %v2304 = vpop.f32.mrf.mxu0
  %v2305 = vadd.f32 %v2256, %v2304
  %v2306 = vpop.f32.mrf.mxu0
  %v2307 = vadd.f32 %v2258, %v2306
  %2308 = vdwg.mxu0
  %2309 = vmatpush.bf16.msra.mxu0 %v2129
  %2310 = vmatpush.bf16.msra.mxu0 %v2128
  %2311 = vmatpush.bf16.msra.mxu0 %v2127
  %2312 = vmatpush.bf16.msra.mxu0 %v2126
  %2313 = vmatpush.bf16.msra.mxu0 %v2125
  %2314 = vmatpush.bf16.msra.mxu0 %v2124
  %2315 = vmatpush.bf16.msra.mxu0 %v2123
  %2316 = vmatpush.bf16.msra.mxu0 %v2122
  %2317 = vmatmul.bf16.gmra.mxu0 %v1877
  %v2318 = vpop.f32.mrf.mxu0
  %v2319 = vadd.f32 %v2270, %v2318
  %v2320 = vpop.f32.mrf.mxu0
  %v2321 = vadd.f32 %v2272, %v2320
  %2322 = vmatmul.bf16.gmra.mxu0 %v1881
  %v2323 = vpop.f32.mrf.mxu0
  %v2324 = vadd.f32 %v2275, %v2323
  %v2325 = vpop.f32.mrf.mxu0
  %v2326 = vadd.f32 %v2277, %v2325
  %2327 = vmatmul.bf16.gmra.mxu0 %v1885
  %v2328 = vpop.f32.mrf.mxu0
  %v2329 = vadd.f32 %v2280, %v2328
  %v2330 = vpop.f32.mrf.mxu0
  %v2331 = vadd.f32 %v2282, %v2330
  %2332 = vmatmul.bf16.gmra.mxu0 %v1889
  %v2333 = vpop.f32.mrf.mxu0
  %v2334 = vadd.f32 %v2285, %v2333
  %v2335 = vpop.f32.mrf.mxu0
  %v2336 = vadd.f32 %v2287, %v2335
  %2337 = vmatmul.bf16.gmra.mxu0 %v1893
  %v2338 = vpop.f32.mrf.mxu0
  %v2339 = vadd.f32 %v2290, %v2338
  %v2340 = vpop.f32.mrf.mxu0
  %v2341 = vadd.f32 %v2292, %v2340
  %2342 = vmatmul.bf16.gmra.mxu0 %v1897
  %v2343 = vpop.f32.mrf.mxu0
  %v2344 = vadd.f32 %v2295, %v2343
  %v2345 = vpop.f32.mrf.mxu0
  %v2346 = vadd.f32 %v2297, %v2345
  %2347 = vmatmul.bf16.gmra.mxu0 %v1901
  %v2348 = vpop.f32.mrf.mxu0
  %v2349 = vadd.f32 %v2300, %v2348
  %v2350 = vpop.f32.mrf.mxu0
  %v2351 = vadd.f32 %v2302, %v2350
  %2352 = vmatmul.bf16.gmra.mxu0 %v1905
  %v2353 = vpop.f32.mrf.mxu0
  %v2354 = vadd.f32 %v2305, %v2353
  %v2355 = vpop.f32.mrf.mxu0
  %v2356 = vadd.f32 %v2307, %v2355
  %2357 = vdwg.mxu0
  %v2358 = vadd.f32 %v1858, %v2319
  %v2359 = vadd.f32 %v1859, %v2321
  %v2360 = vadd.f32 %v1860, %v2324
  %v2361 = vadd.f32 %v1861, %v2326
  %v2362 = vadd.f32 %v1862, %v2329
  %v2363 = vadd.f32 %v1863, %v2331
  %v2364 = vadd.f32 %v1864, %v2334
  %v2365 = vadd.f32 %v1865, %v2336
  %v2366 = vadd.f32 %v1866, %v2339
  %v2367 = vadd.f32 %v1867, %v2341
  %v2368 = vadd.f32 %v1868, %v2344
  %v2369 = vadd.f32 %v1869, %v2346
  %v2370 = vadd.f32 %v1870, %v2349
  %v2371 = vadd.f32 %v1871, %v2351
  %v2372 = vadd.f32 %v1872, %v2354
  %v2373 = vadd.f32 %v1873, %v2356
  %2374 = vst [vmem:[#allocation2] sm:$0xff] %v2358
  %2375 = vst [vmem:[#allocation2 + $0x8] sm:$0xff] %v2359
  %2376 = vst [vmem:[#allocation2 + $0x10] sm:$0xff] %v2360
  %2377 = vst [vmem:[#allocation2 + $0x18] sm:$0xff] %v2361
  %2378 = vst [vmem:[#allocation2 + $0x20] sm:$0xff] %v2362
  %2379 = vst [vmem:[#allocation2 + $0x28] sm:$0xff] %v2363
  %2380 = vst [vmem:[#allocation2 + $0x30] sm:$0xff] %v2364
  %2381 = vst [vmem:[#allocation2 + $0x38] sm:$0xff] %v2365
  %2382 = vst [vmem:[#allocation2 + $0x40] sm:$0xff] %v2366
  %2383 = vst [vmem:[#allocation2 + $0x48] sm:$0xff] %v2367
  %2384 = vst [vmem:[#allocation2 + $0x50] sm:$0xff] %v2368
  %2385 = vst [vmem:[#allocation2 + $0x58] sm:$0xff] %v2369
  %2386 = vst [vmem:[#allocation2 + $0x60] sm:$0xff] %v2370
  %2387 = vst [vmem:[#allocation2 + $0x68] sm:$0xff] %v2371
  %2388 = vst [vmem:[#allocation2 + $0x70] sm:$0xff] %v2372
  %2389 = vst [vmem:[#allocation2 + $0x78] sm:$0xff] %v2373
  // Predicated region
  $region26: #{toy_model_forward.1} parent=0 // pred_check
    %p2390 = pneg %p20
  $region27: #{toy_model_forward.1} parent=0 // pred_check_branch
    %2392 = sbr.rel (%p2390) target = $region29
  $region28: #{toy_model_forward.1} parent=0 // pred_region
    %v2393 = vld [vmem:[#allocation2] sm:$0xff]
    %v2394 = vld [vmem:[#allocation2 + $0x8] sm:$0xff]
    %v2395 = vld [vmem:[#allocation2 + $0x10] sm:$0xff]
    %v2396 = vld [vmem:[#allocation2 + $0x18] sm:$0xff]
    %v2397 = vld [vmem:[#allocation2 + $0x20] sm:$0xff]
    %v2398 = vld [vmem:[#allocation2 + $0x28] sm:$0xff]
    %v2399 = vld [vmem:[#allocation2 + $0x30] sm:$0xff]
    %v2400 = vld [vmem:[#allocation2 + $0x38] sm:$0xff]
    %v2401 = vld [vmem:[#allocation2 + $0x40] sm:$0xff]
    %v2402 = vld [vmem:[#allocation2 + $0x48] sm:$0xff]
    %v2403 = vld [vmem:[#allocation2 + $0x50] sm:$0xff]
    %v2404 = vld [vmem:[#allocation2 + $0x58] sm:$0xff]
    %v2405 = vld [vmem:[#allocation2 + $0x60] sm:$0xff]
    %v2406 = vld [vmem:[#allocation2 + $0x68] sm:$0xff]
    %v2407 = vld [vmem:[#allocation2 + $0x70] sm:$0xff]
    %v2408 = vld [vmem:[#allocation2 + $0x78] sm:$0xff]
    %v2409 = vld [vmem:[%s4] sm:$0x1]
    %v2411 = vperm.slane %v2409, 0
    %v2413 = vadd.f32 %v2393, %v2411
    %v2414 = vadd.f32 %v2394, %v2411
    %v2415 = vadd.f32 %v2395, %v2411
    %v2416 = vadd.f32 %v2396, %v2411
    %v2417 = vadd.f32 %v2397, %v2411
    %v2418 = vadd.f32 %v2398, %v2411
    %v2419 = vadd.f32 %v2399, %v2411
    %v2420 = vadd.f32 %v2400, %v2411
    %v2421 = vadd.f32 %v2401, %v2411
    %v2422 = vadd.f32 %v2402, %v2411
    %v2423 = vadd.f32 %v2403, %v2411
    %v2424 = vadd.f32 %v2404, %v2411
    %v2425 = vadd.f32 %v2405, %v2411
    %v2426 = vadd.f32 %v2406, %v2411
    %v2427 = vadd.f32 %v2407, %v2411
    %v2428 = vadd.f32 %v2408, %v2411
    %2429 = vst [vmem:[%s5] sm:$0xff] %v2413
    %2430 = vst [vmem:[%s5 + $0x8] sm:$0xff] %v2414
    %2431 = vst [vmem:[%s5 + $0x10] sm:$0xff] %v2415
    %2432 = vst [vmem:[%s5 + $0x18] sm:$0xff] %v2416
    %2433 = vst [vmem:[%s5 + $0x20] sm:$0xff] %v2417
    %2434 = vst [vmem:[%s5 + $0x28] sm:$0xff] %v2418
    %2435 = vst [vmem:[%s5 + $0x30] sm:$0xff] %v2419
    %2436 = vst [vmem:[%s5 + $0x38] sm:$0xff] %v2420
    %2437 = vst [vmem:[%s5 + $0x40] sm:$0xff] %v2421
    %2438 = vst [vmem:[%s5 + $0x48] sm:$0xff] %v2422
    %2439 = vst [vmem:[%s5 + $0x50] sm:$0xff] %v2423
    %2440 = vst [vmem:[%s5 + $0x58] sm:$0xff] %v2424
    %2441 = vst [vmem:[%s5 + $0x60] sm:$0xff] %v2425
    %2442 = vst [vmem:[%s5 + $0x68] sm:$0xff] %v2426
    %2443 = vst [vmem:[%s5 + $0x70] sm:$0xff] %v2427
    %2444 = vst [vmem:[%s5 + $0x78] sm:$0xff] %v2428
  $region29: #{toy_model_forward.1} parent=0 // pred_fallthru
    _
  // Predicated region
  $region30: #{toy_model_forward.1} parent=0 // pred_check
    _
  $region31: #{toy_model_forward.1} parent=0 // pred_check_branch
    %2446 = sbr.rel (0) target = $region33
  $region32: #{toy_model_forward.1} parent=0 // pred_region
    _
  $region33: #{toy_model_forward.1} parent=0 // pred_fallthru
    _
  // Predicated region
  $region34: #{toy_model_forward.1} parent=0 // pred_check
    _
  $region35: #{toy_model_forward.1} parent=0 // pred_check_branch
    %2448 = sbr.rel (0) target = $region37
  $region36: #{toy_model_forward.1} parent=0 // pred_region
    _
  $region37: #{toy_model_forward.1} parent=0 // pred_fallthru
    _

</llo_original>
